<compile_context>
chip_gen: v5e
topology: v5e:2x2
jax: 0.10.0
libtpu: 0.0.40
codegen_flags: <defaults>
</compile_context>

<pallas_src>
import jax
import jax.numpy as jnp
from jax.experimental import pallas as pl
from jax.experimental.pallas import tpu as pltpu


# ----------------------------------------------------------------------------
# Fused Pallas kernel factory
# ----------------------------------------------------------------------------
def make_tcn_kernel(B, L, meta):
    """Fused TCN forward for B batch elements per grid step."""
    W, O = meta["W"], meta["O"]
    BL = B * L

    def kernel(x_ref, wp_ref, bp_ref, out_ref):
        # ---- hoisted index vectors (built once, reused everywhere) ----------
        rows = jax.lax.broadcasted_iota(jnp.int32, (BL, 1), 0)
        t_mod = rows % L                       # time index within each element
        col = jax.lax.broadcasted_iota(jnp.int32, (1, W), 1)

        shift_masks = {}                       # trace-time memo: one compare / shift

        def shift_down(v, s):
            # result[b, t] = v[b, t - s] for t >= s, else 0 (per-element causal)
            if s == 0:
                return v
            if s not in shift_masks:
                shift_masks[s] = t_mod >= s
            rolled = pltpu.roll(v, shift=s, axis=0)
            return jnp.where(shift_masks[s], rolled, 0.0)

        # ---- widen the single input channel onto the uniform W-lane slab ----
        x = x_ref[...]                                      # (BL, 1) f32
        y = jnp.where(col == 0, x, 0.0)                     # (BL, W) f32

        # ---- temporal blocks -------------------------------------------------
        for cfg in meta["layers"]:
            K, d = cfg["K"], cfg["d"]

            def conv(z, w_off, b_row, K=K, d=d):
                views = [shift_down(z, (K - 1 - j) * d) for j in range(K)]
                cat = jnp.concatenate(views, axis=1).astype(jnp.bfloat16)  # (BL, K*W)
                w = wp_ref[pl.ds(w_off, K * W), :]                         # (K*W, W) bf16
                b = bp_ref[pl.ds(b_row, 1), :]                             # (1, W) f32
                return jnp.dot(cat, w, preferred_element_type=jnp.float32) + b

            h1 = jnp.maximum(conv(y, cfg["w1_off"], cfg["b1_row"]), 0.0)   # relu1 (+drop id)
            h2 = jnp.maximum(conv(h1, cfg["w2_off"], cfg["b2_row"]), 0.0)  # relu2 (+drop id)

            if cfg["has_down"]:                                            # 1x1 conv residual
                wd = wp_ref[pl.ds(cfg["wd_off"], W), :]
                bd = bp_ref[pl.ds(cfg["bd_row"], 1), :]
                res = jnp.dot(y.astype(jnp.bfloat16), wd,
                              preferred_element_type=jnp.float32) + bd
            else:
                res = y
            y = jnp.maximum(h2 + res, 0.0)                                 # (BL, W)

        # ---- head: last timestep per element, Linear + log_softmax ----------
        last = jnp.concatenate(
            [y[b * L + (L - 1): b * L + L, :] for b in range(B)], axis=0)  # (B, W)
        lw = wp_ref[pl.ds(meta["lin_off"], W), :]                          # (W, W) bf16
        lb = bp_ref[pl.ds(meta["lin_b_row"], 1), :]                        # (1, W) f32
        logits = jnp.dot(last.astype(jnp.bfloat16), lw,
                         preferred_element_type=jnp.float32)[:, :O] + lb[:, :O]
        m = jnp.max(logits, axis=1, keepdims=True)
        z = logits - m
        lse = jnp.log(jnp.sum(jnp.exp(z), axis=1, keepdims=True))
        out_ref[0] = z - lse                                               # (B, O)

    return kernel


# ----------------------------------------------------------------------------
# JAX glue: one pallas_call for the whole network
# ----------------------------------------------------------------------------
def tcn_forward(packed, inputs):
    """Inputs have dimension (N, C_in, L_in) — matches the PyTorch module."""
    Wpack, Bpack, meta = packed["Wpack"], packed["Bpack"], packed["meta"]
    O = meta["O"]
    N = inputs.shape[0]
    x = inputs.reshape(N, -1).astype(jnp.float32)          # view(N, 1, -1) -> (N, L)
    L = x.shape[1]
    x = x.reshape(N * L, 1)                                 # stacked NLC slab, C = 1

    # Grid: fold the batch into the matmul M dim.  Keep 2 parallel chunks when
    # there is enough work (feeds both v7x TensorCores); otherwise one big step
    # (fewer fixed-overhead grid iterations — optimal for v5e/v6e).
    if N % 2 == 0 and ((N // 2) * L) % 8 == 0 and (N // 2) * L >= 128:
        G = 2
    else:
        G = 1
    B = N // G

    kernel = make_tcn_kernel(B, L, meta)
    out = pl.pallas_call(
        kernel,
        out_shape=jax.ShapeDtypeStruct((G, B, O), jnp.float32),
        grid=(G,),
        in_specs=[
            pl.BlockSpec((B * L, 1), lambda g: (g, 0)),     # per-step batch slab
            pl.BlockSpec(Wpack.shape, lambda g: (0, 0)),    # all weights: one operand
            pl.BlockSpec(Bpack.shape, lambda g: (0, 0)),    # all biases:  one operand
        ],
        out_specs=pl.BlockSpec((1, B, O), lambda g: (g, 0, 0)),
        compiler_params=pltpu.CompilerParams(dimension_semantics=("parallel",)),
    )(x, Wpack, Bpack)
    return out.reshape(N, O)


# ----------------------------------------------------------------------------
# Deterministic parameter init (mirrors the PyTorch __init__ / init_weights)
# ----------------------------------------------------------------------------
def init_conv(key, cout, cin, K):
    kv, kb = jax.random.split(key)
    # weight.data.normal_(0, 0.01); weight_norm with g = ||v|| reproduces w = v.
    v = 0.01 * jax.random.normal(kv, (cout, cin, K), dtype=jnp.float32)
    norm = jnp.sqrt(jnp.sum(v * v, axis=(1, 2), keepdims=True))
    w = norm * v / jnp.maximum(norm, 1e-12)                 # (cout, cin, K)
    bound = float((cin * K) ** -0.5)
    b = jax.random.uniform(kb, (1, cout), minval=-bound, maxval=bound,
                           dtype=jnp.float32)
    # (cout, cin, K) -> (K, cin, cout) -> flatten taps onto the contraction dim
    w = jnp.transpose(w, (2, 1, 0)).reshape(K * cin, cout)
    return w, b


def init_params(key, num_channels, kernel_size, output_size):
    layers, cfgs = [], []
    cin = 1  # forward reshapes the input to a single channel
    for i, cout in enumerate(num_channels):
        key, k1, k2, k3 = jax.random.split(key, 4)
        d = 2 ** i
        has_down = cin != cout
        lay = {}
        lay["w1"], lay["b1"] = init_conv(k1, cout, cin, kernel_size)
        lay["w2"], lay["b2"] = init_conv(k2, cout, cout, kernel_size)
        if has_down:
            lay["wd"], lay["bd"] = init_conv(k3, cout, cin, 1)  # (cin, cout)
        layers.append(lay)
        cfgs.append(dict(K=kernel_size, d=d, Cin=cin, Cout=cout, has_down=has_down))
        cin = cout
    key, kw, kb = jax.random.split(key, 3)
    C = num_channels[-1]
    bound = float(C ** -0.5)
    lin_w = jax.random.uniform(kw, (C, output_size), minval=-bound, maxval=bound,
                               dtype=jnp.float32)
    lin_b = jax.random.uniform(kb, (1, output_size), minval=-bound, maxval=bound,
                               dtype=jnp.float32)
    return {"layers": layers, "cfgs": tuple(cfgs), "lin_w": lin_w, "lin_b": lin_b}


# ----------------------------------------------------------------------------
# Host-side packing: every weight in one bf16 slab, every bias in one f32 slab
# ----------------------------------------------------------------------------
def pack_params(params, output_size):
    cfgs = params["cfgs"]
    chans = [c["Cout"] for c in cfgs]
    W = max(max(chans), output_size)
    W = ((W + 7) // 8) * 8        # keeps every row offset 8-sublane aligned

    def embed_w(wflat, K, cin, cout):
        out = jnp.zeros((K * W, W), jnp.float32)
        for j in range(K):
            out = out.at[j * W:j * W + cin, :cout].set(wflat[j * cin:(j + 1) * cin, :])
        return out

    def embed_b(b, cout):
        return jnp.zeros((1, W), jnp.float32).at[:, :cout].set(b)

    w_segs, b_rows, layers = [], [], []
    w_off, b_idx = 0, 0
    for cfg, lay in zip(cfgs, params["layers"]):
        K, d, Cin, Cout = cfg["K"], cfg["d"], cfg["Cin"], cfg["Cout"]
        m = dict(K=K, d=d, has_down=cfg["has_down"])
        m["w1_off"] = w_off; w_segs.append(embed_w(lay["w1"], K, Cin, Cout)); w_off += K * W
        m["w2_off"] = w_off; w_segs.append(embed_w(lay["w2"], K, Cout, Cout)); w_off += K * W
        m["b1_row"] = b_idx; b_rows.append(embed_b(lay["b1"], Cout)); b_idx += 1
        m["b2_row"] = b_idx; b_rows.append(embed_b(lay["b2"], Cout)); b_idx += 1
        if cfg["has_down"]:
            m["wd_off"] = w_off; w_segs.append(embed_w(lay["wd"], 1, Cin, Cout)); w_off += W
            m["bd_row"] = b_idx; b_rows.append(embed_b(lay["bd"], Cout)); b_idx += 1
        layers.append(m)

    C_last = chans[-1]
    lin_off = w_off
    lin_emb = jnp.zeros((W, W), jnp.float32).at[:C_last, :output_size].set(params["lin_w"])
    w_segs.append(lin_emb); w_off += W
    lin_b_row = b_idx
    b_rows.append(embed_b(params["lin_b"], output_size)); b_idx += 1

    Wpack = jnp.concatenate(w_segs, axis=0).astype(jnp.bfloat16)
    Bpack = jnp.concatenate(b_rows, axis=0)
    meta = dict(W=W, O=output_size, layers=tuple(layers),
                lin_off=lin_off, lin_b_row=lin_b_row)
    return {"Wpack": Wpack, "Bpack": Bpack, "meta": meta}


# ----------------------------------------------------------------------------
# Pure-JAX reference (explicit causal padding) for a correctness check
# ----------------------------------------------------------------------------
def tcn_reference(params, inputs):
    N = inputs.shape[0]
    y = jnp.transpose(inputs.reshape(N, 1, -1), (0, 2, 1)).astype(jnp.float32)
    L = y.shape[1]
    for cfg, lay in zip(params["cfgs"], params["layers"]):
        K, d, Cin, Cout = cfg["K"], cfg["d"], cfg["Cin"], cfg["Cout"]
        P = (K - 1) * d

        def conv(z, wflat, b, cin):
            zp = jnp.pad(z, ((0, 0), (P, 0), (0, 0)))
            h = jnp.zeros((N, L, Cout), jnp.float32)
            for j in range(K):
                s = (K - 1 - j) * d
                h = h + jnp.einsum("nlc,co->nlo", zp[:, P - s:P - s + L, :],
                                   wflat[j * cin:(j + 1) * cin, :])
            return h + b

        h1 = jax.nn.relu(conv(y, lay["w1"], lay["b1"], Cin))
        h2 = jax.nn.relu(conv(h1, lay["w2"], lay["b2"], Cout))
        if cfg["has_down"]:
            res = jnp.einsum("nlc,co->nlo", y, lay["wd"]) + lay["bd"]
        else:
            res = y
        y = jax.nn.relu(h2 + res)
    logits = y[:, -1, :] @ params["lin_w"] + params["lin_b"]
    return jax.nn.log_softmax(logits, axis=-1)


if __name__ == "__main__":
    key = jax.random.PRNGKey(0)
    kx, kp = jax.random.split(key)

    # (N, C_in, L_in) as the PyTorch forward expects; flattens to L = 64.
    inputs = jax.random.normal(kx, (4, 4, 16), dtype=jnp.float32)

    num_channels = [16, 16, 32]
    params = init_params(kp, num_channels, kernel_size=2, output_size=8)
    packed = pack_params(params, output_size=8)

    out = jax.block_until_ready(tcn_forward(packed, inputs))
    ref = jax.block_until_ready(tcn_reference(params, inputs))

    assert out.shape == (4, 8), out.shape
    # log_softmax rows must exponentiate-sum to 1
    assert bool(jnp.allclose(jnp.sum(jnp.exp(out), axis=1), 1.0, atol=1e-4))
    # matches the explicit-padding reference (tolerance covers bf16 weights/MXU)
    assert bool(jnp.allclose(out, ref, atol=3e-2)), (out, ref)
    print("KERNEL_OK")
</pallas_src>

<mosaic_0001>
module attributes {stable_mosaic.version = 11 : i64} {
  func.func @kernel(%arg0: i32, %arg1: memref<128x1xf32, #tpu.memory_space<vmem>>, %arg2: memref<480x32xbf16, #tpu.memory_space<vmem>>, %arg3: memref<9x32xf32, #tpu.memory_space<vmem>>, %arg4: memref<1x2x8xf32, #tpu.memory_space<vmem>>) attributes {dimension_semantics = [#tpu.dimension_semantics<parallel>], iteration_bounds = array<i64: 2>, scalar_prefetch = 0 : i64, scratch_operands = 0 : i64, tpu.core_type = #tpu.core_type<tc>, window_params = [{transform_indices = @transform_0, window_bounds = array<i64: 128, 1>}, {pipeline_mode = #tpu.pipeline_mode<synchronous>, transform_indices = @transform_1, window_bounds = array<i64: 480, 32>}, {pipeline_mode = #tpu.pipeline_mode<synchronous>, transform_indices = @transform_2, window_bounds = array<i64: 9, 32>}, {transform_indices = @transform_3, window_bounds = array<i64: 1, 2, 8>}]} {
    %0 = tpu.iota {dimensions = array<i32: 0>} : vector<128x1xi32>
    %c64_i32 = arith.constant 64 : i32
    %c0_i32 = arith.constant 0 : i32
    %1 = arith.cmpi eq, %c64_i32, %c0_i32 : i32
    %c1_i32 = arith.constant 1 : i32
    %2 = arith.select %1, %c1_i32, %c64_i32 : i32
    %3 = vector.broadcast %2 : i32 to vector<128x1xi32>
    %4 = arith.remsi %0, %3 : vector<128x1xi32>
    %c0_i32_0 = arith.constant 0 : i32
    %5 = vector.broadcast %c0_i32_0 : i32 to vector<128x1xi32>
    %6 = arith.cmpi ne, %4, %5 : vector<128x1xi32>
    %c0_i32_1 = arith.constant 0 : i32
    %7 = vector.broadcast %c0_i32_1 : i32 to vector<128x1xi32>
    %8 = arith.cmpi slt, %4, %7 : vector<128x1xi32>
    %c0_i32_2 = arith.constant 0 : i32
    %9 = arith.cmpi slt, %2, %c0_i32_2 : i32
    %10 = vector.broadcast %9 : i1 to vector<128x1xi1>
    %11 = vector.broadcast %10 : vector<128x1xi1> to vector<128x1xi1>
    %12 = arith.xori %8, %11 : vector<128x1xi1>
    %13 = arith.andi %12, %6 : vector<128x1xi1>
    %14 = vector.broadcast %2 : i32 to vector<128x1xi32>
    %15 = arith.addi %4, %14 : vector<128x1xi32>
    %16 = arith.select %13, %15, %4 : vector<128x1xi1>, vector<128x1xi32>
    %17 = tpu.iota {dimensions = array<i32: 1>} : vector<1x32xi32>
    %c0 = arith.constant 0 : index
    %c0_3 = arith.constant 0 : index
    %18 = vector.load %arg1[%c0, %c0_3] : memref<128x1xf32, #tpu.memory_space<vmem>>, vector<128x1xf32>
    %c0_i32_4 = arith.constant 0 : i32
    %19 = vector.broadcast %c0_i32_4 : i32 to vector<1x32xi32>
    %20 = arith.cmpi eq, %17, %19 : vector<1x32xi32>
    %cst = arith.constant 0.000000e+00 : f32
    %21 = vector.shape_cast %20 : vector<1x32xi1> to vector<1x32xi1>
    %22 = vector.broadcast %21 : vector<1x32xi1> to vector<128x32xi1>
    %23 = vector.shape_cast %18 : vector<128x1xf32> to vector<128x1xf32>
    %24 = vector.broadcast %23 : vector<128x1xf32> to vector<128x32xf32>
    %25 = vector.broadcast %cst : f32 to vector<128x32xf32>
    %26 = arith.select %22, %24, %25 : vector<128x32xi1>, vector<128x32xf32>
    %c1_i32_5 = arith.constant 1 : i32
    %27 = vector.broadcast %c1_i32_5 : i32 to vector<128x1xi32>
    %28 = arith.cmpi sge, %16, %27 : vector<128x1xi32>
    %c1_i32_6 = arith.constant 1 : i32
    %29 = tpu.dynamic_rotate %26 by %c1_i32_6 dim 0 : vector<128x32xf32>, i32 -> vector<128x32xf32>
    %cst_7 = arith.constant 0.000000e+00 : f32
    %30 = vector.shape_cast %28 : vector<128x1xi1> to vector<128x1xi1>
    %31 = vector.broadcast %30 : vector<128x1xi1> to vector<128x32xi1>
    %32 = vector.broadcast %cst_7 : f32 to vector<128x32xf32>
    %33 = arith.select %31, %29, %32 : vector<128x32xi1>, vector<128x32xf32>
    %34 = tpu.concatenate %33, %26 in 1 : vector<128x32xf32>, vector<128x32xf32> -> vector<128x64xf32>
    %35 = arith.truncf %34 : vector<128x64xf32> to vector<128x64xbf16>
    %c0_8 = arith.constant 0 : index
    %c0_9 = arith.constant 0 : index
    %36 = vector.load %arg2[%c0_8, %c0_9] : memref<480x32xbf16, #tpu.memory_space<vmem>>, vector<64x32xbf16>
    %c0_10 = arith.constant 0 : index
    %c0_11 = arith.constant 0 : index
    %37 = vector.load %arg3[%c0_10, %c0_11] : memref<9x32xf32, #tpu.memory_space<vmem>>, vector<1x32xf32>
    %cst_12 = arith.constant dense<0.000000e+00> : vector<128x32xf32>
    %38 = tpu.matmul %35, %36, %cst_12 {dimension_numbers = #tpu.dot_dimension_numbers<[1], [0], [0], [1], [0, 0, 1, 1], [], []>} : vector<128x64xbf16>, vector<64x32xbf16>, vector<128x32xf32> -> vector<128x32xf32>
    %39 = vector.broadcast %37 : vector<1x32xf32> to vector<128x32xf32>
    %40 = arith.addf %38, %39 : vector<128x32xf32>
    %cst_13 = arith.constant 0.000000e+00 : f32
    %41 = vector.broadcast %cst_13 : f32 to vector<128x32xf32>
    %42 = arith.maximumf %40, %41 : vector<128x32xf32>
    %c1_i32_14 = arith.constant 1 : i32
    %43 = tpu.dynamic_rotate %42 by %c1_i32_14 dim 0 : vector<128x32xf32>, i32 -> vector<128x32xf32>
    %cst_15 = arith.constant 0.000000e+00 : f32
    %44 = vector.shape_cast %28 : vector<128x1xi1> to vector<128x1xi1>
    %45 = vector.broadcast %44 : vector<128x1xi1> to vector<128x32xi1>
    %46 = vector.broadcast %cst_15 : f32 to vector<128x32xf32>
    %47 = arith.select %45, %43, %46 : vector<128x32xi1>, vector<128x32xf32>
    %48 = tpu.concatenate %47, %42 in 1 : vector<128x32xf32>, vector<128x32xf32> -> vector<128x64xf32>
    %49 = arith.truncf %48 : vector<128x64xf32> to vector<128x64xbf16>
    %c64 = arith.constant 64 : index
    %c0_16 = arith.constant 0 : index
    %50 = vector.load %arg2[%c64, %c0_16] : memref<480x32xbf16, #tpu.memory_space<vmem>>, vector<64x32xbf16>
    %c1 = arith.constant 1 : index
    %c0_17 = arith.constant 0 : index
    %51 = vector.load %arg3[%c1, %c0_17] : memref<9x32xf32, #tpu.memory_space<vmem>>, vector<1x32xf32>
    %cst_18 = arith.constant dense<0.000000e+00> : vector<128x32xf32>
    %52 = tpu.matmul %49, %50, %cst_18 {dimension_numbers = #tpu.dot_dimension_numbers<[1], [0], [0], [1], [0, 0, 1, 1], [], []>} : vector<128x64xbf16>, vector<64x32xbf16>, vector<128x32xf32> -> vector<128x32xf32>
    %53 = vector.broadcast %51 : vector<1x32xf32> to vector<128x32xf32>
    %54 = arith.addf %52, %53 : vector<128x32xf32>
    %cst_19 = arith.constant 0.000000e+00 : f32
    %55 = vector.broadcast %cst_19 : f32 to vector<128x32xf32>
    %56 = arith.maximumf %54, %55 : vector<128x32xf32>
    %c128 = arith.constant 128 : index
    %c0_20 = arith.constant 0 : index
    %57 = vector.load %arg2[%c128, %c0_20] : memref<480x32xbf16, #tpu.memory_space<vmem>>, vector<32x32xbf16>
    %c2 = arith.constant 2 : index
    %c0_21 = arith.constant 0 : index
    %58 = vector.load %arg3[%c2, %c0_21] : memref<9x32xf32, #tpu.memory_space<vmem>>, vector<1x32xf32>
    %59 = arith.truncf %26 : vector<128x32xf32> to vector<128x32xbf16>
    %cst_22 = arith.constant dense<0.000000e+00> : vector<128x32xf32>
    %60 = tpu.matmul %59, %57, %cst_22 {dimension_numbers = #tpu.dot_dimension_numbers<[1], [0], [0], [1], [0, 0, 1, 1], [], []>} : vector<128x32xbf16>, vector<32x32xbf16>, vector<128x32xf32> -> vector<128x32xf32>
    %61 = vector.broadcast %58 : vector<1x32xf32> to vector<128x32xf32>
    %62 = arith.addf %60, %61 : vector<128x32xf32>
    %63 = arith.addf %56, %62 : vector<128x32xf32>
    %cst_23 = arith.constant 0.000000e+00 : f32
    %64 = vector.broadcast %cst_23 : f32 to vector<128x32xf32>
    %65 = arith.maximumf %63, %64 : vector<128x32xf32>
    %c2_i32 = arith.constant 2 : i32
    %66 = vector.broadcast %c2_i32 : i32 to vector<128x1xi32>
    %67 = arith.cmpi sge, %16, %66 : vector<128x1xi32>
    %c2_i32_24 = arith.constant 2 : i32
    %68 = tpu.dynamic_rotate %65 by %c2_i32_24 dim 0 : vector<128x32xf32>, i32 -> vector<128x32xf32>
    %cst_25 = arith.constant 0.000000e+00 : f32
    %69 = vector.shape_cast %67 : vector<128x1xi1> to vector<128x1xi1>
    %70 = vector.broadcast %69 : vector<128x1xi1> to vector<128x32xi1>
    %71 = vector.broadcast %cst_25 : f32 to vector<128x32xf32>
    %72 = arith.select %70, %68, %71 : vector<128x32xi1>, vector<128x32xf32>
    %73 = tpu.concatenate %72, %65 in 1 : vector<128x32xf32>, vector<128x32xf32> -> vector<128x64xf32>
    %74 = arith.truncf %73 : vector<128x64xf32> to vector<128x64xbf16>
    %c160 = arith.constant 160 : index
    %c0_26 = arith.constant 0 : index
    %75 = vector.load %arg2[%c160, %c0_26] : memref<480x32xbf16, #tpu.memory_space<vmem>>, vector<64x32xbf16>
    %c3 = arith.constant 3 : index
    %c0_27 = arith.constant 0 : index
    %76 = vector.load %arg3[%c3, %c0_27] : memref<9x32xf32, #tpu.memory_space<vmem>>, vector<1x32xf32>
    %cst_28 = arith.constant dense<0.000000e+00> : vector<128x32xf32>
    %77 = tpu.matmul %74, %75, %cst_28 {dimension_numbers = #tpu.dot_dimension_numbers<[1], [0], [0], [1], [0, 0, 1, 1], [], []>} : vector<128x64xbf16>, vector<64x32xbf16>, vector<128x32xf32> -> vector<128x32xf32>
    %78 = vector.broadcast %76 : vector<1x32xf32> to vector<128x32xf32>
    %79 = arith.addf %77, %78 : vector<128x32xf32>
    %cst_29 = arith.constant 0.000000e+00 : f32
    %80 = vector.broadcast %cst_29 : f32 to vector<128x32xf32>
    %81 = arith.maximumf %79, %80 : vector<128x32xf32>
    %c2_i32_30 = arith.constant 2 : i32
    %82 = tpu.dynamic_rotate %81 by %c2_i32_30 dim 0 : vector<128x32xf32>, i32 -> vector<128x32xf32>
    %cst_31 = arith.constant 0.000000e+00 : f32
    %83 = vector.shape_cast %67 : vector<128x1xi1> to vector<128x1xi1>
    %84 = vector.broadcast %83 : vector<128x1xi1> to vector<128x32xi1>
    %85 = vector.broadcast %cst_31 : f32 to vector<128x32xf32>
    %86 = arith.select %84, %82, %85 : vector<128x32xi1>, vector<128x32xf32>
    %87 = tpu.concatenate %86, %81 in 1 : vector<128x32xf32>, vector<128x32xf32> -> vector<128x64xf32>
    %88 = arith.truncf %87 : vector<128x64xf32> to vector<128x64xbf16>
    %c224 = arith.constant 224 : index
    %c0_32 = arith.constant 0 : index
    %89 = vector.load %arg2[%c224, %c0_32] : memref<480x32xbf16, #tpu.memory_space<vmem>>, vector<64x32xbf16>
    %c4 = arith.constant 4 : index
    %c0_33 = arith.constant 0 : index
    %90 = vector.load %arg3[%c4, %c0_33] : memref<9x32xf32, #tpu.memory_space<vmem>>, vector<1x32xf32>
    %cst_34 = arith.constant dense<0.000000e+00> : vector<128x32xf32>
    %91 = tpu.matmul %88, %89, %cst_34 {dimension_numbers = #tpu.dot_dimension_numbers<[1], [0], [0], [1], [0, 0, 1, 1], [], []>} : vector<128x64xbf16>, vector<64x32xbf16>, vector<128x32xf32> -> vector<128x32xf32>
    %92 = vector.broadcast %90 : vector<1x32xf32> to vector<128x32xf32>
    %93 = arith.addf %91, %92 : vector<128x32xf32>
    %cst_35 = arith.constant 0.000000e+00 : f32
    %94 = vector.broadcast %cst_35 : f32 to vector<128x32xf32>
    %95 = arith.maximumf %93, %94 : vector<128x32xf32>
    %96 = arith.addf %95, %65 : vector<128x32xf32>
    %cst_36 = arith.constant 0.000000e+00 : f32
    %97 = vector.broadcast %cst_36 : f32 to vector<128x32xf32>
    %98 = arith.maximumf %96, %97 : vector<128x32xf32>
    %c4_i32 = arith.constant 4 : i32
    %99 = vector.broadcast %c4_i32 : i32 to vector<128x1xi32>
    %100 = arith.cmpi sge, %16, %99 : vector<128x1xi32>
    %c4_i32_37 = arith.constant 4 : i32
    %101 = tpu.dynamic_rotate %98 by %c4_i32_37 dim 0 : vector<128x32xf32>, i32 -> vector<128x32xf32>
    %cst_38 = arith.constant 0.000000e+00 : f32
    %102 = vector.shape_cast %100 : vector<128x1xi1> to vector<128x1xi1>
    %103 = vector.broadcast %102 : vector<128x1xi1> to vector<128x32xi1>
    %104 = vector.broadcast %cst_38 : f32 to vector<128x32xf32>
    %105 = arith.select %103, %101, %104 : vector<128x32xi1>, vector<128x32xf32>
    %106 = tpu.concatenate %105, %98 in 1 : vector<128x32xf32>, vector<128x32xf32> -> vector<128x64xf32>
    %107 = arith.truncf %106 : vector<128x64xf32> to vector<128x64xbf16>
    %c288 = arith.constant 288 : index
    %c0_39 = arith.constant 0 : index
    %108 = vector.load %arg2[%c288, %c0_39] : memref<480x32xbf16, #tpu.memory_space<vmem>>, vector<64x32xbf16>
    %c5 = arith.constant 5 : index
    %c0_40 = arith.constant 0 : index
    %109 = vector.load %arg3[%c5, %c0_40] : memref<9x32xf32, #tpu.memory_space<vmem>>, vector<1x32xf32>
    %cst_41 = arith.constant dense<0.000000e+00> : vector<128x32xf32>
    %110 = tpu.matmul %107, %108, %cst_41 {dimension_numbers = #tpu.dot_dimension_numbers<[1], [0], [0], [1], [0, 0, 1, 1], [], []>} : vector<128x64xbf16>, vector<64x32xbf16>, vector<128x32xf32> -> vector<128x32xf32>
    %111 = vector.broadcast %109 : vector<1x32xf32> to vector<128x32xf32>
    %112 = arith.addf %110, %111 : vector<128x32xf32>
    %cst_42 = arith.constant 0.000000e+00 : f32
    %113 = vector.broadcast %cst_42 : f32 to vector<128x32xf32>
    %114 = arith.maximumf %112, %113 : vector<128x32xf32>
    %c4_i32_43 = arith.constant 4 : i32
    %115 = tpu.dynamic_rotate %114 by %c4_i32_43 dim 0 : vector<128x32xf32>, i32 -> vector<128x32xf32>
    %cst_44 = arith.constant 0.000000e+00 : f32
    %116 = vector.shape_cast %100 : vector<128x1xi1> to vector<128x1xi1>
    %117 = vector.broadcast %116 : vector<128x1xi1> to vector<128x32xi1>
    %118 = vector.broadcast %cst_44 : f32 to vector<128x32xf32>
    %119 = arith.select %117, %115, %118 : vector<128x32xi1>, vector<128x32xf32>
    %120 = tpu.concatenate %119, %114 in 1 : vector<128x32xf32>, vector<128x32xf32> -> vector<128x64xf32>
    %121 = arith.truncf %120 : vector<128x64xf32> to vector<128x64xbf16>
    %c352 = arith.constant 352 : index
    %c0_45 = arith.constant 0 : index
    %122 = vector.load %arg2[%c352, %c0_45] : memref<480x32xbf16, #tpu.memory_space<vmem>>, vector<64x32xbf16>
    %c6 = arith.constant 6 : index
    %c0_46 = arith.constant 0 : index
    %123 = vector.load %arg3[%c6, %c0_46] : memref<9x32xf32, #tpu.memory_space<vmem>>, vector<1x32xf32>
    %cst_47 = arith.constant dense<0.000000e+00> : vector<128x32xf32>
    %124 = tpu.matmul %121, %122, %cst_47 {dimension_numbers = #tpu.dot_dimension_numbers<[1], [0], [0], [1], [0, 0, 1, 1], [], []>} : vector<128x64xbf16>, vector<64x32xbf16>, vector<128x32xf32> -> vector<128x32xf32>
    %125 = vector.broadcast %123 : vector<1x32xf32> to vector<128x32xf32>
    %126 = arith.addf %124, %125 : vector<128x32xf32>
    %cst_48 = arith.constant 0.000000e+00 : f32
    %127 = vector.broadcast %cst_48 : f32 to vector<128x32xf32>
    %128 = arith.maximumf %126, %127 : vector<128x32xf32>
    %c416 = arith.constant 416 : index
    %c0_49 = arith.constant 0 : index
    %129 = vector.load %arg2[%c416, %c0_49] : memref<480x32xbf16, #tpu.memory_space<vmem>>, vector<32x32xbf16>
    %c7 = arith.constant 7 : index
    %c0_50 = arith.constant 0 : index
    %130 = vector.load %arg3[%c7, %c0_50] : memref<9x32xf32, #tpu.memory_space<vmem>>, vector<1x32xf32>
    %131 = arith.truncf %98 : vector<128x32xf32> to vector<128x32xbf16>
    %cst_51 = arith.constant dense<0.000000e+00> : vector<128x32xf32>
    %132 = tpu.matmul %131, %129, %cst_51 {dimension_numbers = #tpu.dot_dimension_numbers<[1], [0], [0], [1], [0, 0, 1, 1], [], []>} : vector<128x32xbf16>, vector<32x32xbf16>, vector<128x32xf32> -> vector<128x32xf32>
    %133 = vector.broadcast %130 : vector<1x32xf32> to vector<128x32xf32>
    %134 = arith.addf %132, %133 : vector<128x32xf32>
    %135 = arith.addf %128, %134 : vector<128x32xf32>
    %cst_52 = arith.constant 0.000000e+00 : f32
    %136 = vector.broadcast %cst_52 : f32 to vector<128x32xf32>
    %137 = arith.maximumf %135, %136 : vector<128x32xf32>
    %138 = vector.extract_strided_slice %137 {offsets = [63, 0], sizes = [1, 32], strides = [1, 1]} : vector<128x32xf32> to vector<1x32xf32>
    %139 = vector.extract_strided_slice %137 {offsets = [127, 0], sizes = [1, 32], strides = [1, 1]} : vector<128x32xf32> to vector<1x32xf32>
    %140 = tpu.concatenate %138, %139 in 0 : vector<1x32xf32>, vector<1x32xf32> -> vector<2x32xf32>
    %c448 = arith.constant 448 : index
    %c0_53 = arith.constant 0 : index
    %141 = vector.load %arg2[%c448, %c0_53] : memref<480x32xbf16, #tpu.memory_space<vmem>>, vector<32x32xbf16>
    %c8 = arith.constant 8 : index
    %c0_54 = arith.constant 0 : index
    %142 = vector.load %arg3[%c8, %c0_54] : memref<9x32xf32, #tpu.memory_space<vmem>>, vector<1x32xf32>
    %143 = arith.truncf %140 : vector<2x32xf32> to vector<2x32xbf16>
    %cst_55 = arith.constant dense<0.000000e+00> : vector<2x32xf32>
    %144 = tpu.matmul %143, %141, %cst_55 {dimension_numbers = #tpu.dot_dimension_numbers<[1], [0], [0], [1], [0, 0, 1, 1], [], []>} : vector<2x32xbf16>, vector<32x32xbf16>, vector<2x32xf32> -> vector<2x32xf32>
    %145 = vector.extract_strided_slice %144 {offsets = [0, 0], sizes = [2, 8], strides = [1, 1]} : vector<2x32xf32> to vector<2x8xf32>
    %146 = vector.extract_strided_slice %142 {offsets = [0, 0], sizes = [1, 8], strides = [1, 1]} : vector<1x32xf32> to vector<1x8xf32>
    %147 = vector.broadcast %146 : vector<1x8xf32> to vector<2x8xf32>
    %148 = arith.addf %145, %147 : vector<2x8xf32>
    %cst_56 = arith.constant dense<0xFF800000> : vector<2xf32>
    %149 = vector.multi_reduction <maximumf>, %148, %cst_56 [1] : vector<2x8xf32> to vector<2xf32>
    %150 = vector.shape_cast %149 : vector<2xf32> to vector<2x1xf32>
    %151 = vector.broadcast %150 : vector<2x1xf32> to vector<2x8xf32>
    %152 = arith.subf %148, %151 : vector<2x8xf32>
    %153 = math.exp %152 : vector<2x8xf32>
    %cst_57 = arith.constant dense<0.000000e+00> : vector<2xf32>
    %154 = vector.multi_reduction <add>, %153, %cst_57 [1] : vector<2x8xf32> to vector<2xf32>
    %155 = vector.shape_cast %154 : vector<2xf32> to vector<2x1xf32>
    %156 = math.log %155 : vector<2x1xf32>
    %157 = vector.broadcast %156 : vector<2x1xf32> to vector<2x8xf32>
    %158 = arith.subf %152, %157 : vector<2x8xf32>
    %c0_58 = arith.constant 0 : index
    %c0_59 = arith.constant 0 : index
    %c0_60 = arith.constant 0 : index
    %159 = vector.load %arg4[%c0_58, %c0_59, %c0_60] : memref<1x2x8xf32, #tpu.memory_space<vmem>>, vector<1x2x8xf32>
    %160 = vector.shape_cast %159 : vector<1x2x8xf32> to vector<2x8xf32>
    %161 = vector.shape_cast %158 : vector<2x8xf32> to vector<1x2x8xf32>
    tpu.vector_store %arg4[%c0_58, %c0_59, %c0_60], %161 {strides = array<i32>} : memref<1x2x8xf32, #tpu.memory_space<vmem>>, vector<1x2x8xf32>,
    return
  }
  func.func @transform_0(%arg0: i32) -> (i32, i32) {
    %c0_i32 = arith.constant 0 : i32
    %c0_i32_0 = arith.constant 0 : i32
    return %arg0, %c0_i32 : i32, i32
  }
  func.func @transform_1(%arg0: i32) -> (i32, i32) {
    %c0_i32 = arith.constant 0 : i32
    %c0_i32_0 = arith.constant 0 : i32
    %c0_i32_1 = arith.constant 0 : i32
    return %c0_i32, %c0_i32_0 : i32, i32
  }
  func.func @transform_2(%arg0: i32) -> (i32, i32) {
    %c0_i32 = arith.constant 0 : i32
    %c0_i32_0 = arith.constant 0 : i32
    %c0_i32_1 = arith.constant 0 : i32
    return %c0_i32, %c0_i32_0 : i32, i32
  }
  func.func @transform_3(%arg0: i32) -> (i32, i32, i32) {
    %c0_i32 = arith.constant 0 : i32
    %c0_i32_0 = arith.constant 0 : i32
    %c0_i32_1 = arith.constant 0 : i32
    return %arg0, %c0_i32, %c0_i32_0 : i32, i32, i32
  }
}

</mosaic_0001>

<llo_original>
// kernel: tpu_custom_call.1
$region0: #{tpu_custom_call.1}
  #allocation0 [shape = 'u32[]', space=smem, size = 0x4, offset = 0x4, fixed_abs, tag = 'smem constant byte address 0x4 - core index']
  #allocation1 [shape = 'u32[72,128]{1,0:T(1,128)}', space=vmem, size = 0x9000, scoped, tag = 'internal scratch']
  %s0 = inlined_call_operand.vmem [shape: f32[256,1], index: 0, kind: input, shape index: {}]
  %s1 = inlined_call_operand.vmem [shape: bf16[480,32], index: 1, kind: input, shape index: {}]
  %s2 = inlined_call_operand.vmem [shape: f32[9,32], index: 2, kind: input, shape index: {}]
  %s3 = inlined_call_operand.hbm [shape: f32[2,2,8], index: 3, kind: output, shape index: {}]
  %s4 = sld [smem:[#allocation0]]
  $region45: #{tpu_custom_call.1} parent=0
    _
  %s6 = ssub.s32 1, %s4
  %s7 = scalar_select 0, %s6, %s4
  $region1: #{tpu_custom_call.1} parent=0
    #allocation2 [shape = 'u8[2048]{0}', space=vmem, size = 0x800, scoped, tag = 'output window, operand 0']
    #allocation3 [shape = 's32[2]{0}', space=sflag, size = 0x8, scoped, tag = 'scoped memory for tpu_custom_call.1']
    %8 = vsyncpa [#allocation3], 0
    %s9 = scalar_lea.sflag [#allocation3], 1
    %10 = vsyncpa %s9, 0
    loop: start=0, step=1, limit=4
    $region2: #{tpu_custom_call.1} parent=1 // loop_pre_header
      _
    $region3: #{tpu_custom_call.1} parent=1 // loop_header
      %s12 = sphi 0, %s16
      %p13 = scmp.ge.s32.totalorder %s12, 4
      %s22 = sphi 0, %s24
      %s25 = sphi 0, %s22
      %s26 = sphi 0, %s25
      %s42 = sphi 0, %s26
      %s46 = sphi 0, %s46
      %s48 = sphi 0, %s46
      %s49 = sphi 0, %s48
      %s63 = sphi 0, %s49
      %s67 = sphi 0, %s67
      %s69 = sphi 0, %s67
      %s70 = sphi 0, %s69
      %s84 = sphi 0, %s70
      %s90 = sphi 0, %s92
      %s93 = sphi 0, %s90
      %s94 = sphi 0, %s93
      %s110 = sphi 0, %s94
    $region4: #{tpu_custom_call.1} parent=1 // loop_header_branch
      %15 = sbr.rel (%p13) target = $region8
    $region5: #{tpu_custom_call.1} parent=1 // loop_body
      %s17 = ssub.s32 %s12, 1
      %s18 = ssub.s32 %s12, 2
      %s19 = sadd.s32 %s12, 1
      %s20 = ssub.s32 %s12, %s19
      %p21 = scmp.eq.s32.totalorder %s20, 0
      %s23 = sadd.s32 %s22, 1
      %s24 = scalar_select %p21, %s22, %s23
      %p27 = pneg %p21
      %p28 = scmp.eq.s32.totalorder %s12, 1
      %p29 = por %p27, %p28
      %p30 = scmp.ne.s32.totalorder %s22, %s25
      %p31 = scmp.eq.s32.totalorder %s12, 0
      %p32 = por %p30, %p31
      %p33 = scmp.ne.s32.totalorder %s22, %s25
      %p34 = scmp.eq.s32.totalorder %s17, 1
      %p35 = por %p33, %p34
      %p36 = scmp.ne.s32.totalorder %s25, %s26
      %p37 = scmp.eq.s32.totalorder %s17, 0
      %p38 = por %p36, %p37
      %p39 = scmp.ne.s32.totalorder %s25, %s26
      %p40 = scmp.eq.s32.totalorder %s18, 1
      %p41 = por %p39, %p40
      %p43 = scmp.ne.s32.totalorder %s26, %s42
      %p44 = scmp.eq.s32.totalorder %s18, 0
      %p45 = por %p43, %p44
      %s47 = sadd.s32 %s46, 1
      %p50 = scmp.eq.s32.totalorder %s12, 1
      %p51 = scmp.ne.s32.totalorder %s46, %s48
      %p52 = scmp.eq.s32.totalorder %s12, 0
      %p53 = por %p51, %p52
      %p54 = scmp.ne.s32.totalorder %s46, %s48
      %p55 = scmp.eq.s32.totalorder %s17, 1
      %p56 = por %p54, %p55
      %p57 = scmp.ne.s32.totalorder %s48, %s49
      %p58 = scmp.eq.s32.totalorder %s17, 0
      %p59 = por %p57, %p58
      %p60 = scmp.ne.s32.totalorder %s48, %s49
      %p61 = scmp.eq.s32.totalorder %s18, 1
      %p62 = por %p60, %p61
      %p64 = scmp.ne.s32.totalorder %s49, %s63
      %p65 = scmp.eq.s32.totalorder %s18, 0
      %p66 = por %p64, %p65
      %s68 = sadd.s32 %s67, 1
      %p71 = scmp.eq.s32.totalorder %s12, 1
      %p72 = scmp.ne.s32.totalorder %s67, %s69
      %p73 = scmp.eq.s32.totalorder %s12, 0
      %p74 = por %p72, %p73
      %p75 = scmp.ne.s32.totalorder %s67, %s69
      %p76 = scmp.eq.s32.totalorder %s17, 1
      %p77 = por %p75, %p76
      %p78 = scmp.ne.s32.totalorder %s69, %s70
      %p79 = scmp.eq.s32.totalorder %s17, 0
      %p80 = por %p78, %p79
      %p81 = scmp.ne.s32.totalorder %s69, %s70
      %p82 = scmp.eq.s32.totalorder %s18, 1
      %p83 = por %p81, %p82
      %p85 = scmp.ne.s32.totalorder %s70, %s84
      %p86 = scmp.eq.s32.totalorder %s18, 0
      %p87 = por %p85, %p86
      %s88 = ssub.s32 %s12, %s19
      %p89 = scmp.eq.s32.totalorder %s88, 0
      %s91 = sadd.s32 %s90, 1
      %s92 = scalar_select %p89, %s90, %s91
      %p95 = pneg %p89
      %p96 = scmp.eq.s32.totalorder %s12, 1
      %p97 = por %p95, %p96
      %p98 = scmp.ne.s32.totalorder %s90, %s93
      %p99 = scmp.eq.s32.totalorder %s12, 0
      %p100 = por %p98, %p99
      %p101 = scmp.ne.s32.totalorder %s90, %s93
      %p102 = scmp.eq.s32.totalorder %s17, 1
      %p103 = por %p101, %p102
      %p104 = scmp.ne.s32.totalorder %s93, %s94
      %p105 = scmp.eq.s32.totalorder %s17, 0
      %p106 = por %p104, %p105
      %p107 = scmp.ne.s32.totalorder %s93, %s94
      %p108 = scmp.eq.s32.totalorder %s18, 1
      %p109 = por %p107, %p108
      %p111 = scmp.ne.s32.totalorder %s94, %s110
      %p112 = scmp.eq.s32.totalorder %s18, 0
      %p113 = por %p111, %p112
      %p114 = scmp.le.s32.totalorder 1, %s12
      %p115 = scmp.lt.s32.totalorder %s12, 3
      %p116 = pnand %p114, %p115
      %p117 = pneg %p116
      // Predicated region
      $region9: #{tpu_custom_call.1} parent=5 // pred_check
        _
      $region10: #{tpu_custom_call.1} parent=5 // pred_check_branch
        %119 = sbr.rel (%p116) target = $region12
      $region11: #{tpu_custom_call.1} parent=5 // pred_region
        %s120 = ssub.s32 %s12, 1
        // Predicated region
        $region13: #{tpu_custom_call.1} parent=11 // pred_check
          %p121 = pneg %p59
        $region14: #{tpu_custom_call.1} parent=11 // pred_check_branch
          %123 = sbr.rel (%p121) target = $region16
        $region15: #{tpu_custom_call.1} parent=11 // pred_region
          _
        $region16: #{tpu_custom_call.1} parent=11 // pred_fallthru
          _
        // Predicated region
        $region17: #{tpu_custom_call.1} parent=11 // pred_check
          %p124 = pneg %p80
        $region18: #{tpu_custom_call.1} parent=11 // pred_check_branch
          %126 = sbr.rel (%p124) target = $region20
        $region19: #{tpu_custom_call.1} parent=11 // pred_region
          _
        $region20: #{tpu_custom_call.1} parent=11 // pred_fallthru
          _
      $region12: #{tpu_custom_call.1} parent=5 // pred_fallthru
        _
      %p127 = scmp.lt.s32.totalorder %s12, 2
      // Predicated region
      $region21: #{tpu_custom_call.1} parent=5 // pred_check
        %p128 = pneg %p127
      $region22: #{tpu_custom_call.1} parent=5 // pred_check_branch
        %130 = sbr.rel (%p128) target = $region24
      $region23: #{tpu_custom_call.1} parent=5 // pred_region
        // Predicated region
        $region25: #{tpu_custom_call.1} parent=23 // pred_check
          %p131 = pneg %p32
        $region26: #{tpu_custom_call.1} parent=23 // pred_check_branch
          %133 = sbr.rel (%p131) target = $region28
        $region27: #{tpu_custom_call.1} parent=23 // pred_region
          %s134 = smul.u32 16, %s12
          %p135 = scmp.lt.s32.totalorder %s134, 31
          %s136 = scalar_select %p135, %s134, 31
          %s137 = smul.addr %s136, 8
          %s138 = scalar_lea.vmem %s0, %s137
          %s139 = smul.u32 16, %s12
        $region28: #{tpu_custom_call.1} parent=23 // pred_fallthru
          _
      $region24: #{tpu_custom_call.1} parent=5 // pred_fallthru
        _
      %p140 = scmp.le.s32.totalorder 1, %s12
      %p141 = scmp.lt.s32.totalorder %s12, 3
      %p142 = pnand %p140, %p141
      %p143 = pneg %p142
      // Predicated region
      $region29: #{tpu_custom_call.1} parent=5 // pred_check
        _
      $region30: #{tpu_custom_call.1} parent=5 // pred_check_branch
        %145 = sbr.rel (%p142) target = $region32
      $region31: #{tpu_custom_call.1} parent=5 // pred_region
        %s146 = ssub.s32 %s12, 1
        %s147 = smul.u32 16, %s17
        %p148 = scmp.lt.s32.totalorder %s147, 31
        %s149 = scalar_select %p148, %s147, 31
        %s150 = smul.addr %s149, 8
        %s151 = scalar_lea.vmem %s0, %s150
        %p152 = pneg %p38
        %p153 = pneg %p35
        %p154 = pneg %p59
        %p155 = pneg %p56
        %p156 = pneg %p80
        %p157 = pneg %p77
        %p158 = pneg %p106
        %p159 = pneg %p103
        %s160 = sand.u32 %s93, 1
        %s161 = scalar_lea.sflag [#allocation3], %s160
        %s162 = sand.u32 %s93, 1
        %s163 = smul.addr %s162, 2
        %s164 = scalar_lea.vmem [#allocation2], %s163
        %s165 = smul.u32 16, %s17
        %p166 = scmp.lt.s32.totalorder %s165, 31
        %s167 = scalar_select %p166, %s165, 31
        %s168 = smul.addr %s167, 8
        %s169 = scalar_lea.vmem %s0, %s168
        %s170 = smul.u32 16, %s17
        %v172 = vlaneseq
        %v173 = vshrl.u32 %v172, 7
        %v174 = vadd.s32 %v173, 8
        %v175 = vadd.s32 %v173, 16
        %v176 = vadd.s32 %v173, 24
        %v177 = vadd.s32 %v173, 32
        %v178 = vadd.s32 %v173, 40
        %v179 = vadd.s32 %v173, 48
        %v180 = vadd.s32 %v173, 56
        %v181 = vadd.s32 %v173, 64
        %v182 = vadd.s32 %v173, 72
        %v183 = vadd.s32 %v173, 80
        %v184 = vadd.s32 %v173, 88
        %v185 = vadd.s32 %v173, 96
        %v186 = vadd.s32 %v173, 104
        %v187 = vadd.s32 %v173, 112
        %v188 = vadd.s32 %v173, 120
        %vm189 = vcmp.lt.s32.totalorder %v173, 0
        %v190 = vsub.s32 0, %v173
        %v191 = vsel %vm189, %v190, %v173
        %v192 = vshrl.u32 %v191, 6
        %v193 = vand.u32 %v191, 63
        %v194 = vsub.s32 0, %v193
        %v195 = vsel %vm189, %v194, %v193
        %vm196 = vcmp.lt.s32.totalorder %v174, 0
        %v197 = vsub.s32 0, %v174
        %v198 = vsel %vm196, %v197, %v174
        %v199 = vshrl.u32 %v198, 6
        %v200 = vand.u32 %v198, 63
        %v201 = vsub.s32 0, %v200
        %v202 = vsel %vm196, %v201, %v200
        %vm203 = vcmp.lt.s32.totalorder %v175, 0
        %v204 = vsub.s32 0, %v175
        %v205 = vsel %vm203, %v204, %v175
        %v206 = vshrl.u32 %v205, 6
        %v207 = vand.u32 %v205, 63
        %v208 = vsub.s32 0, %v207
        %v209 = vsel %vm203, %v208, %v207
        %vm210 = vcmp.lt.s32.totalorder %v176, 0
        %v211 = vsub.s32 0, %v176
        %v212 = vsel %vm210, %v211, %v176
        %v213 = vshrl.u32 %v212, 6
        %v214 = vand.u32 %v212, 63
        %v215 = vsub.s32 0, %v214
        %v216 = vsel %vm210, %v215, %v214
        %vm217 = vcmp.lt.s32.totalorder %v177, 0
        %v218 = vsub.s32 0, %v177
        %v219 = vsel %vm217, %v218, %v177
        %v220 = vshrl.u32 %v219, 6
        %v221 = vand.u32 %v219, 63
        %v222 = vsub.s32 0, %v221
        %v223 = vsel %vm217, %v222, %v221
        %vm224 = vcmp.lt.s32.totalorder %v178, 0
        %v225 = vsub.s32 0, %v178
        %v226 = vsel %vm224, %v225, %v178
        %v227 = vshrl.u32 %v226, 6
        %v228 = vand.u32 %v226, 63
        %v229 = vsub.s32 0, %v228
        %v230 = vsel %vm224, %v229, %v228
        %vm231 = vcmp.lt.s32.totalorder %v179, 0
        %v232 = vsub.s32 0, %v179
        %v233 = vsel %vm231, %v232, %v179
        %v234 = vshrl.u32 %v233, 6
        %v235 = vand.u32 %v233, 63
        %v236 = vsub.s32 0, %v235
        %v237 = vsel %vm231, %v236, %v235
        %vm238 = vcmp.lt.s32.totalorder %v180, 0
        %v239 = vsub.s32 0, %v180
        %v240 = vsel %vm238, %v239, %v180
        %v241 = vshrl.u32 %v240, 6
        %v242 = vand.u32 %v240, 63
        %v243 = vsub.s32 0, %v242
        %v244 = vsel %vm238, %v243, %v242
        %vm245 = vcmp.lt.s32.totalorder %v181, 0
        %v246 = vsub.s32 0, %v181
        %v247 = vsel %vm245, %v246, %v181
        %v248 = vshrl.u32 %v247, 6
        %v249 = vand.u32 %v247, 63
        %v250 = vsub.s32 0, %v249
        %v251 = vsel %vm245, %v250, %v249
        %vm252 = vcmp.lt.s32.totalorder %v182, 0
        %v253 = vsub.s32 0, %v182
        %v254 = vsel %vm252, %v253, %v182
        %v255 = vshrl.u32 %v254, 6
        %v256 = vand.u32 %v254, 63
        %v257 = vsub.s32 0, %v256
        %v258 = vsel %vm252, %v257, %v256
        %vm259 = vcmp.lt.s32.totalorder %v183, 0
        %v260 = vsub.s32 0, %v183
        %v261 = vsel %vm259, %v260, %v183
        %v262 = vshrl.u32 %v261, 6
        %v263 = vand.u32 %v261, 63
        %v264 = vsub.s32 0, %v263
        %v265 = vsel %vm259, %v264, %v263
        %vm266 = vcmp.lt.s32.totalorder %v184, 0
        %v267 = vsub.s32 0, %v184
        %v268 = vsel %vm266, %v267, %v184
        %v269 = vshrl.u32 %v268, 6
        %v270 = vand.u32 %v268, 63
        %v271 = vsub.s32 0, %v270
        %v272 = vsel %vm266, %v271, %v270
        %vm273 = vcmp.lt.s32.totalorder %v185, 0
        %v274 = vsub.s32 0, %v185
        %v275 = vsel %vm273, %v274, %v185
        %v276 = vshrl.u32 %v275, 6
        %v277 = vand.u32 %v275, 63
        %v278 = vsub.s32 0, %v277
        %v279 = vsel %vm273, %v278, %v277
        %vm280 = vcmp.lt.s32.totalorder %v186, 0
        %v281 = vsub.s32 0, %v186
        %v282 = vsel %vm280, %v281, %v186
        %v283 = vshrl.u32 %v282, 6
        %v284 = vand.u32 %v282, 63
        %v285 = vsub.s32 0, %v284
        %v286 = vsel %vm280, %v285, %v284
        %vm287 = vcmp.lt.s32.totalorder %v187, 0
        %v288 = vsub.s32 0, %v187
        %v289 = vsel %vm287, %v288, %v187
        %v290 = vshrl.u32 %v289, 6
        %v291 = vand.u32 %v289, 63
        %v292 = vsub.s32 0, %v291
        %v293 = vsel %vm287, %v292, %v291
        %vm294 = vcmp.lt.s32.totalorder %v188, 0
        %v295 = vsub.s32 0, %v188
        %v296 = vsel %vm294, %v295, %v188
        %v297 = vshrl.u32 %v296, 6
        %v298 = vand.u32 %v296, 63
        %v299 = vsub.s32 0, %v298
        %v300 = vsel %vm294, %v299, %v298
        %vm301 = vcmp.ne.s32.totalorder %v195, 0
        %vm302 = vcmp.ne.s32.totalorder %v202, 0
        %vm303 = vcmp.ne.s32.totalorder %v209, 0
        %vm304 = vcmp.ne.s32.totalorder %v216, 0
        %vm305 = vcmp.ne.s32.totalorder %v223, 0
        %vm306 = vcmp.ne.s32.totalorder %v230, 0
        %vm307 = vcmp.ne.s32.totalorder %v237, 0
        %vm308 = vcmp.ne.s32.totalorder %v244, 0
        %vm309 = vcmp.ne.s32.totalorder %v251, 0
        %vm310 = vcmp.ne.s32.totalorder %v258, 0
        %vm311 = vcmp.ne.s32.totalorder %v265, 0
        %vm312 = vcmp.ne.s32.totalorder %v272, 0
        %vm313 = vcmp.ne.s32.totalorder %v279, 0
        %vm314 = vcmp.ne.s32.totalorder %v286, 0
        %vm315 = vcmp.ne.s32.totalorder %v293, 0
        %vm316 = vcmp.ne.s32.totalorder %v300, 0
        %vm317 = vcmp.lt.s32.totalorder %v195, 0
        %vm318 = vcmp.lt.s32.totalorder %v202, 0
        %vm319 = vcmp.lt.s32.totalorder %v209, 0
        %vm320 = vcmp.lt.s32.totalorder %v216, 0
        %vm321 = vcmp.lt.s32.totalorder %v223, 0
        %vm322 = vcmp.lt.s32.totalorder %v230, 0
        %vm323 = vcmp.lt.s32.totalorder %v237, 0
        %vm324 = vcmp.lt.s32.totalorder %v244, 0
        %vm325 = vcmp.lt.s32.totalorder %v251, 0
        %vm326 = vcmp.lt.s32.totalorder %v258, 0
        %vm327 = vcmp.lt.s32.totalorder %v265, 0
        %vm328 = vcmp.lt.s32.totalorder %v272, 0
        %vm329 = vcmp.lt.s32.totalorder %v279, 0
        %vm330 = vcmp.lt.s32.totalorder %v286, 0
        %vm331 = vcmp.lt.s32.totalorder %v293, 0
        %vm332 = vcmp.lt.s32.totalorder %v300, 0
        %vm333 = vmand %vm317, %vm301
        %vm334 = vmand %vm318, %vm302
        %vm335 = vmand %vm319, %vm303
        %vm336 = vmand %vm320, %vm304
        %vm337 = vmand %vm321, %vm305
        %vm338 = vmand %vm322, %vm306
        %vm339 = vmand %vm323, %vm307
        %vm340 = vmand %vm324, %vm308
        %vm341 = vmand %vm325, %vm309
        %vm342 = vmand %vm326, %vm310
        %vm343 = vmand %vm327, %vm311
        %vm344 = vmand %vm328, %vm312
        %vm345 = vmand %vm329, %vm313
        %vm346 = vmand %vm330, %vm314
        %vm347 = vmand %vm331, %vm315
        %vm348 = vmand %vm332, %vm316
        %v349 = vadd.s32 %v195, 64
        %v350 = vadd.s32 %v202, 64
        %v351 = vadd.s32 %v209, 64
        %v352 = vadd.s32 %v216, 64
        %v353 = vadd.s32 %v223, 64
        %v354 = vadd.s32 %v230, 64
        %v355 = vadd.s32 %v237, 64
        %v356 = vadd.s32 %v244, 64
        %v357 = vadd.s32 %v251, 64
        %v358 = vadd.s32 %v258, 64
        %v359 = vadd.s32 %v265, 64
        %v360 = vadd.s32 %v272, 64
        %v361 = vadd.s32 %v279, 64
        %v362 = vadd.s32 %v286, 64
        %v363 = vadd.s32 %v293, 64
        %v364 = vadd.s32 %v300, 64
        %v365 = vsel %vm333, %v349, %v195
        %v366 = vsel %vm334, %v350, %v202
        %v367 = vsel %vm335, %v351, %v209
        %v368 = vsel %vm336, %v352, %v216
        %v369 = vsel %vm337, %v353, %v223
        %v370 = vsel %vm338, %v354, %v230
        %v371 = vsel %vm339, %v355, %v237
        %v372 = vsel %vm340, %v356, %v244
        %v373 = vsel %vm341, %v357, %v251
        %v374 = vsel %vm342, %v358, %v258
        %v375 = vsel %vm343, %v359, %v265
        %v376 = vsel %vm344, %v360, %v272
        %v377 = vsel %vm345, %v361, %v279
        %v378 = vsel %vm346, %v362, %v286
        %v379 = vsel %vm347, %v363, %v293
        %v380 = vsel %vm348, %v364, %v300
        %v381 = vlaneseq
        %v382 = vand.u32 %v381, 127
        %v383 = vld [vmem:[%s169] sm:$0xff]
        %v384 = vld [vmem:[%s169 + $0x8] sm:$0xff]
        %v385 = vld [vmem:[%s169 + $0x10] sm:$0xff]
        %v386 = vld [vmem:[%s169 + $0x18] sm:$0xff]
        %v387 = vld [vmem:[%s169 + $0x20] sm:$0xff]
        %v388 = vld [vmem:[%s169 + $0x28] sm:$0xff]
        %v389 = vld [vmem:[%s169 + $0x30] sm:$0xff]
        %v390 = vld [vmem:[%s169 + $0x38] sm:$0xff]
        %v391 = vld [vmem:[%s169 + $0x40] sm:$0xff]
        %v392 = vld [vmem:[%s169 + $0x48] sm:$0xff]
        %v393 = vld [vmem:[%s169 + $0x50] sm:$0xff]
        %v394 = vld [vmem:[%s169 + $0x58] sm:$0xff]
        %v395 = vld [vmem:[%s169 + $0x60] sm:$0xff]
        %v396 = vld [vmem:[%s169 + $0x68] sm:$0xff]
        %v397 = vld [vmem:[%s169 + $0x70] sm:$0xff]
        %v398 = vld [vmem:[%s169 + $0x78] sm:$0xff]
        %vm399 = vcmp.eq.s32.totalorder %v382, 0
        %v400 = vsel %vm399, 1, 0
        %vm401 = vcmp.eq.s32.totalorder %v400, 1
        %403 = vset.pattern.permute.xlu0 0
        %404 = vperm.xlu0 %403, %v383
        %v405 = vpop.permute.xlu0 %404
        %408 = vset.pattern.permute.xlu0 0
        %409 = vperm.xlu0 %408, %v384
        %v410 = vpop.permute.xlu0 %409
        %413 = vset.pattern.permute.xlu0 0
        %414 = vperm.xlu0 %413, %v385
        %v415 = vpop.permute.xlu0 %414
        %418 = vset.pattern.permute.xlu0 0
        %419 = vperm.xlu0 %418, %v386
        %v420 = vpop.permute.xlu0 %419
        %423 = vset.pattern.permute.xlu0 0
        %424 = vperm.xlu0 %423, %v387
        %v425 = vpop.permute.xlu0 %424
        %428 = vset.pattern.permute.xlu0 0
        %429 = vperm.xlu0 %428, %v388
        %v430 = vpop.permute.xlu0 %429
        %433 = vset.pattern.permute.xlu0 0
        %434 = vperm.xlu0 %433, %v389
        %v435 = vpop.permute.xlu0 %434
        %438 = vset.pattern.permute.xlu0 0
        %439 = vperm.xlu0 %438, %v390
        %v440 = vpop.permute.xlu0 %439
        %443 = vset.pattern.permute.xlu0 0
        %444 = vperm.xlu0 %443, %v391
        %v445 = vpop.permute.xlu0 %444
        %448 = vset.pattern.permute.xlu0 0
        %449 = vperm.xlu0 %448, %v392
        %v450 = vpop.permute.xlu0 %449
        %453 = vset.pattern.permute.xlu0 0
        %454 = vperm.xlu0 %453, %v393
        %v455 = vpop.permute.xlu0 %454
        %458 = vset.pattern.permute.xlu0 0
        %459 = vperm.xlu0 %458, %v394
        %v460 = vpop.permute.xlu0 %459
        %463 = vset.pattern.permute.xlu0 0
        %464 = vperm.xlu0 %463, %v395
        %v465 = vpop.permute.xlu0 %464
        %468 = vset.pattern.permute.xlu0 0
        %469 = vperm.xlu0 %468, %v396
        %v470 = vpop.permute.xlu0 %469
        %473 = vset.pattern.permute.xlu0 0
        %474 = vperm.xlu0 %473, %v397
        %v475 = vpop.permute.xlu0 %474
        %478 = vset.pattern.permute.xlu0 0
        %479 = vperm.xlu0 %478, %v398
        %v480 = vpop.permute.xlu0 %479
        %v482 = vsel %vm401, %v405, 0.0
        %v483 = vsel %vm401, %v410, 0.0
        %v484 = vsel %vm401, %v415, 0.0
        %v485 = vsel %vm401, %v420, 0.0
        %v486 = vsel %vm401, %v425, 0.0
        %v487 = vsel %vm401, %v430, 0.0
        %v488 = vsel %vm401, %v435, 0.0
        %v489 = vsel %vm401, %v440, 0.0
        %v490 = vsel %vm401, %v445, 0.0
        %v491 = vsel %vm401, %v450, 0.0
        %v492 = vsel %vm401, %v455, 0.0
        %v493 = vsel %vm401, %v460, 0.0
        %v494 = vsel %vm401, %v465, 0.0
        %v495 = vsel %vm401, %v470, 0.0
        %v496 = vsel %vm401, %v475, 0.0
        %v497 = vsel %vm401, %v480, 0.0
        %vm498 = vcmp.ge.s32.totalorder %v365, 1
        %vm499 = vcmp.ge.s32.totalorder %v366, 1
        %vm500 = vcmp.ge.s32.totalorder %v367, 1
        %vm501 = vcmp.ge.s32.totalorder %v368, 1
        %vm502 = vcmp.ge.s32.totalorder %v369, 1
        %vm503 = vcmp.ge.s32.totalorder %v370, 1
        %vm504 = vcmp.ge.s32.totalorder %v371, 1
        %vm505 = vcmp.ge.s32.totalorder %v372, 1
        %vm506 = vcmp.ge.s32.totalorder %v373, 1
        %vm507 = vcmp.ge.s32.totalorder %v374, 1
        %vm508 = vcmp.ge.s32.totalorder %v375, 1
        %vm509 = vcmp.ge.s32.totalorder %v376, 1
        %vm510 = vcmp.ge.s32.totalorder %v377, 1
        %vm511 = vcmp.ge.s32.totalorder %v378, 1
        %vm512 = vcmp.ge.s32.totalorder %v379, 1
        %vm513 = vcmp.ge.s32.totalorder %v380, 1
        %v514 = vrot.slane %v482, 7
        %v515 = vrot.slane %v483, 7
        %v516 = vrot.slane %v484, 7
        %v517 = vrot.slane %v485, 7
        %v518 = vrot.slane %v486, 7
        %v519 = vrot.slane %v487, 7
        %v520 = vrot.slane %v488, 7
        %v521 = vrot.slane %v489, 7
        %v522 = vrot.slane %v490, 7
        %v523 = vrot.slane %v491, 7
        %v524 = vrot.slane %v492, 7
        %v525 = vrot.slane %v493, 7
        %v526 = vrot.slane %v494, 7
        %v527 = vrot.slane %v495, 7
        %v528 = vrot.slane %v496, 7
        %v529 = vrot.slane %v497, 7
        %vm530 = vcmp.lt.s32.totalorder %v173, 1
        %v531 = vsel %vm530, %v528, %v529
        %v532 = vsel %vm530, %v527, %v528
        %v533 = vsel %vm530, %v526, %v527
        %v534 = vsel %vm530, %v525, %v526
        %v535 = vsel %vm530, %v524, %v525
        %v536 = vsel %vm530, %v523, %v524
        %v537 = vsel %vm530, %v522, %v523
        %v538 = vsel %vm530, %v521, %v522
        %v539 = vsel %vm530, %v520, %v521
        %v540 = vsel %vm530, %v519, %v520
        %v541 = vsel %vm530, %v518, %v519
        %v542 = vsel %vm530, %v517, %v518
        %v543 = vsel %vm530, %v516, %v517
        %v544 = vsel %vm530, %v515, %v516
        %v545 = vsel %vm530, %v514, %v515
        %v546 = vsel %vm530, %v529, %v514
        %v547 = vsel %vm498, 1, 0
        %v548 = vsel %vm499, 1, 0
        %v549 = vsel %vm500, 1, 0
        %v550 = vsel %vm501, 1, 0
        %v551 = vsel %vm502, 1, 0
        %v552 = vsel %vm503, 1, 0
        %v553 = vsel %vm504, 1, 0
        %v554 = vsel %vm505, 1, 0
        %v555 = vsel %vm506, 1, 0
        %v556 = vsel %vm507, 1, 0
        %v557 = vsel %vm508, 1, 0
        %v558 = vsel %vm509, 1, 0
        %v559 = vsel %vm510, 1, 0
        %v560 = vsel %vm511, 1, 0
        %v561 = vsel %vm512, 1, 0
        %v562 = vsel %vm513, 1, 0
        %vm563 = vcmp.eq.s32.totalorder %v547, 1
        %vm564 = vcmp.eq.s32.totalorder %v548, 1
        %vm565 = vcmp.eq.s32.totalorder %v549, 1
        %vm566 = vcmp.eq.s32.totalorder %v550, 1
        %vm567 = vcmp.eq.s32.totalorder %v551, 1
        %vm568 = vcmp.eq.s32.totalorder %v552, 1
        %vm569 = vcmp.eq.s32.totalorder %v553, 1
        %vm570 = vcmp.eq.s32.totalorder %v554, 1
        %vm571 = vcmp.eq.s32.totalorder %v555, 1
        %vm572 = vcmp.eq.s32.totalorder %v556, 1
        %vm573 = vcmp.eq.s32.totalorder %v557, 1
        %vm574 = vcmp.eq.s32.totalorder %v558, 1
        %vm575 = vcmp.eq.s32.totalorder %v559, 1
        %vm576 = vcmp.eq.s32.totalorder %v560, 1
        %vm577 = vcmp.eq.s32.totalorder %v561, 1
        %vm578 = vcmp.eq.s32.totalorder %v562, 1
        %v579 = vsel %vm563, %v546, 0.0
        %v580 = vsel %vm564, %v545, 0.0
        %v581 = vsel %vm565, %v544, 0.0
        %v582 = vsel %vm566, %v543, 0.0
        %v583 = vsel %vm567, %v542, 0.0
        %v584 = vsel %vm568, %v541, 0.0
        %v585 = vsel %vm569, %v540, 0.0
        %v586 = vsel %vm570, %v539, 0.0
        %v587 = vsel %vm571, %v538, 0.0
        %v588 = vsel %vm572, %v537, 0.0
        %v589 = vsel %vm573, %v536, 0.0
        %v590 = vsel %vm574, %v535, 0.0
        %v591 = vsel %vm575, %v534, 0.0
        %v592 = vsel %vm576, %v533, 0.0
        %v593 = vsel %vm577, %v532, 0.0
        %v594 = vsel %vm578, %v531, 0.0
        %611 = vrot.lane.b32.xlu0 %v482, 32
        %v612 = vpop.permute.xlu0 %611
        %613 = vrot.lane.b32.xlu0 %v483, 32
        %v614 = vpop.permute.xlu0 %613
        %615 = vrot.lane.b32.xlu0 %v484, 32
        %v616 = vpop.permute.xlu0 %615
        %617 = vrot.lane.b32.xlu0 %v485, 32
        %v618 = vpop.permute.xlu0 %617
        %619 = vrot.lane.b32.xlu0 %v486, 32
        %v620 = vpop.permute.xlu0 %619
        %621 = vrot.lane.b32.xlu0 %v487, 32
        %v622 = vpop.permute.xlu0 %621
        %623 = vrot.lane.b32.xlu0 %v488, 32
        %v624 = vpop.permute.xlu0 %623
        %625 = vrot.lane.b32.xlu0 %v489, 32
        %v626 = vpop.permute.xlu0 %625
        %627 = vrot.lane.b32.xlu0 %v490, 32
        %v628 = vpop.permute.xlu0 %627
        %629 = vrot.lane.b32.xlu0 %v491, 32
        %v630 = vpop.permute.xlu0 %629
        %631 = vrot.lane.b32.xlu0 %v492, 32
        %v632 = vpop.permute.xlu0 %631
        %633 = vrot.lane.b32.xlu0 %v493, 32
        %v634 = vpop.permute.xlu0 %633
        %635 = vrot.lane.b32.xlu0 %v494, 32
        %v636 = vpop.permute.xlu0 %635
        %637 = vrot.lane.b32.xlu0 %v495, 32
        %v638 = vpop.permute.xlu0 %637
        %639 = vrot.lane.b32.xlu0 %v496, 32
        %v640 = vpop.permute.xlu0 %639
        %641 = vrot.lane.b32.xlu0 %v497, 32
        %v642 = vpop.permute.xlu0 %641
        %vm659 = vcmask 261120
        %v660 = vsel %vm659, %v579, %v612
        %v661 = vsel %vm659, %v580, %v614
        %v662 = vsel %vm659, %v581, %v616
        %v663 = vsel %vm659, %v582, %v618
        %v664 = vsel %vm659, %v583, %v620
        %v665 = vsel %vm659, %v584, %v622
        %v666 = vsel %vm659, %v585, %v624
        %v667 = vsel %vm659, %v586, %v626
        %v668 = vsel %vm659, %v587, %v628
        %v669 = vsel %vm659, %v588, %v630
        %v670 = vsel %vm659, %v589, %v632
        %v671 = vsel %vm659, %v590, %v634
        %v672 = vsel %vm659, %v591, %v636
        %v673 = vsel %vm659, %v592, %v638
        %v674 = vsel %vm659, %v593, %v640
        %v675 = vsel %vm659, %v594, %v642
        %v676 = vpack.c.bf16 %v661, %v660
        %v677 = vpack.c.bf16 %v663, %v662
        %v678 = vpack.c.bf16 %v665, %v664
        %v679 = vpack.c.bf16 %v667, %v666
        %v680 = vpack.c.bf16 %v669, %v668
        %v681 = vpack.c.bf16 %v671, %v670
        %v682 = vpack.c.bf16 %v673, %v672
        %v683 = vpack.c.bf16 %v675, %v674
        %v684 = vld [vmem:[%s1] sm:$0xf]
        %v685 = vld [vmem:[%s1 + $0x4] sm:$0xf]
        %v686 = vld [vmem:[%s1 + $0x8] sm:$0xf]
        %v687 = vld [vmem:[%s1 + $0xc] sm:$0xf]
        %v688 = vld [vmem:[%s1 + $0x10] sm:$0xf]
        %v689 = vld [vmem:[%s1 + $0x14] sm:$0xf]
        %v690 = vld [vmem:[%s1 + $0x18] sm:$0xf]
        %v691 = vld [vmem:[%s1 + $0x1c] sm:$0xf]
        %v692 = vld [vmem:[%s2] sm:$0x1]
        %v693 = vperm.slane %v692, 0
        %v702 = vunpack.c.l.b16 %v684
        %v703 = vunpack.c.l.b16 %v685
        %v704 = vunpack.c.l.b16 %v686
        %v705 = vunpack.c.l.b16 %v687
        %v706 = vunpack.c.l.b16 %v688
        %v707 = vunpack.c.l.b16 %v689
        %v708 = vunpack.c.l.b16 %v690
        %v709 = vunpack.c.l.b16 %v691
        %v710 = vpack.c.b16 %v703, %v702
        %v711 = vpack.c.b16 %v705, %v704
        %v712 = vpack.c.b16 %v707, %v706
        %v713 = vpack.c.b16 %v709, %v708
        %vm718 = vcmask 523264
        %v720 = vsel %vm718, %v676, 0
        %v723 = vsel %vm718, %v677, 0
        %v726 = vsel %vm718, %v678, 0
        %v729 = vsel %vm718, %v679, 0
        %v732 = vsel %vm718, %v680, 0
        %v735 = vsel %vm718, %v681, 0
        %v738 = vsel %vm718, %v682, 0
        %v741 = vsel %vm718, %v683, 0
        %743 = vmatpush.bf16.msra.mxu0 0
        %744 = vmatpush.bf16.msra.mxu0 0
        %745 = vmatpush.bf16.msra.mxu0 0
        %746 = vmatpush.bf16.msra.mxu0 0
        %747 = vmatpush.bf16.msra.mxu0 %v713
        %748 = vmatpush.bf16.msra.mxu0 %v712
        %749 = vmatpush.bf16.msra.mxu0 %v711
        %750 = vmatpush.bf16.msra.mxu0 %v710
        %751 = vmatmul.bf16.gmra.mxu0 %v720
        %v752 = vpop.f32.mrf.mxu0
        %v753 = vadd.f32 %v693, %v752
        %v754 = vpop.f32.mrf.mxu0
        %v755 = vadd.f32 %v693, %v754
        %756 = vmatmul.bf16.gmra.mxu0 %v723
        %v757 = vpop.f32.mrf.mxu0
        %v758 = vadd.f32 %v693, %v757
        %v759 = vpop.f32.mrf.mxu0
        %v760 = vadd.f32 %v693, %v759
        %761 = vmatmul.bf16.gmra.mxu0 %v726
        %v762 = vpop.f32.mrf.mxu0
        %v763 = vadd.f32 %v693, %v762
        %v764 = vpop.f32.mrf.mxu0
        %v765 = vadd.f32 %v693, %v764
        %766 = vmatmul.bf16.gmra.mxu0 %v729
        %v767 = vpop.f32.mrf.mxu0
        %v768 = vadd.f32 %v693, %v767
        %v769 = vpop.f32.mrf.mxu0
        %v770 = vadd.f32 %v693, %v769
        %771 = vmatmul.bf16.gmra.mxu0 %v732
        %v772 = vpop.f32.mrf.mxu0
        %v773 = vadd.f32 %v693, %v772
        %v774 = vpop.f32.mrf.mxu0
        %v775 = vadd.f32 %v693, %v774
        %776 = vmatmul.bf16.gmra.mxu0 %v735
        %v777 = vpop.f32.mrf.mxu0
        %v778 = vadd.f32 %v693, %v777
        %v779 = vpop.f32.mrf.mxu0
        %v780 = vadd.f32 %v693, %v779
        %781 = vmatmul.bf16.gmra.mxu0 %v738
        %v782 = vpop.f32.mrf.mxu0
        %v783 = vadd.f32 %v693, %v782
        %v784 = vpop.f32.mrf.mxu0
        %v785 = vadd.f32 %v693, %v784
        %786 = vmatmul.bf16.gmra.mxu0 %v741
        %v787 = vpop.f32.mrf.mxu0
        %v788 = vadd.f32 %v693, %v787
        %v789 = vpop.f32.mrf.mxu0
        %v790 = vadd.f32 %v693, %v789
        %791 = vdwg.mxu0
        %v792 = vmax.f32 %v753, 0.0
        %v793 = vmax.f32 %v755, 0.0
        %v794 = vmax.f32 %v758, 0.0
        %v795 = vmax.f32 %v760, 0.0
        %v796 = vmax.f32 %v763, 0.0
        %v797 = vmax.f32 %v765, 0.0
        %v798 = vmax.f32 %v768, 0.0
        %v799 = vmax.f32 %v770, 0.0
        %v800 = vmax.f32 %v773, 0.0
        %v801 = vmax.f32 %v775, 0.0
        %v802 = vmax.f32 %v778, 0.0
        %v803 = vmax.f32 %v780, 0.0
        %v804 = vmax.f32 %v783, 0.0
        %v805 = vmax.f32 %v785, 0.0
        %v806 = vmax.f32 %v788, 0.0
        %v807 = vmax.f32 %v790, 0.0
        %v808 = vrot.slane %v792, 7
        %v809 = vrot.slane %v793, 7
        %v810 = vrot.slane %v794, 7
        %v811 = vrot.slane %v795, 7
        %v812 = vrot.slane %v796, 7
        %v813 = vrot.slane %v797, 7
        %v814 = vrot.slane %v798, 7
        %v815 = vrot.slane %v799, 7
        %v816 = vrot.slane %v800, 7
        %v817 = vrot.slane %v801, 7
        %v818 = vrot.slane %v802, 7
        %v819 = vrot.slane %v803, 7
        %v820 = vrot.slane %v804, 7
        %v821 = vrot.slane %v805, 7
        %v822 = vrot.slane %v806, 7
        %v823 = vrot.slane %v807, 7
        %v824 = vsel %vm530, %v822, %v823
        %v825 = vsel %vm530, %v821, %v822
        %v826 = vsel %vm530, %v820, %v821
        %v827 = vsel %vm530, %v819, %v820
        %v828 = vsel %vm530, %v818, %v819
        %v829 = vsel %vm530, %v817, %v818
        %v830 = vsel %vm530, %v816, %v817
        %v831 = vsel %vm530, %v815, %v816
        %v832 = vsel %vm530, %v814, %v815
        %v833 = vsel %vm530, %v813, %v814
        %v834 = vsel %vm530, %v812, %v813
        %v835 = vsel %vm530, %v811, %v812
        %v836 = vsel %vm530, %v810, %v811
        %v837 = vsel %vm530, %v809, %v810
        %v838 = vsel %vm530, %v808, %v809
        %v839 = vsel %vm530, %v823, %v808
        %v840 = vsel %vm563, %v839, 0.0
        %v841 = vsel %vm564, %v838, 0.0
        %v842 = vsel %vm565, %v837, 0.0
        %v843 = vsel %vm566, %v836, 0.0
        %v844 = vsel %vm567, %v835, 0.0
        %v845 = vsel %vm568, %v834, 0.0
        %v846 = vsel %vm569, %v833, 0.0
        %v847 = vsel %vm570, %v832, 0.0
        %v848 = vsel %vm571, %v831, 0.0
        %v849 = vsel %vm572, %v830, 0.0
        %v850 = vsel %vm573, %v829, 0.0
        %v851 = vsel %vm574, %v828, 0.0
        %v852 = vsel %vm575, %v827, 0.0
        %v853 = vsel %vm576, %v826, 0.0
        %v854 = vsel %vm577, %v825, 0.0
        %v855 = vsel %vm578, %v824, 0.0
        %872 = vrot.lane.b32.xlu0 %v792, 32
        %v873 = vpop.permute.xlu0 %872
        %874 = vrot.lane.b32.xlu0 %v793, 32
        %v875 = vpop.permute.xlu0 %874
        %876 = vrot.lane.b32.xlu0 %v794, 32
        %v877 = vpop.permute.xlu0 %876
        %878 = vrot.lane.b32.xlu0 %v795, 32
        %v879 = vpop.permute.xlu0 %878
        %880 = vrot.lane.b32.xlu0 %v796, 32
        %v881 = vpop.permute.xlu0 %880
        %882 = vrot.lane.b32.xlu0 %v797, 32
        %v883 = vpop.permute.xlu0 %882
        %884 = vrot.lane.b32.xlu0 %v798, 32
        %v885 = vpop.permute.xlu0 %884
        %886 = vrot.lane.b32.xlu0 %v799, 32
        %v887 = vpop.permute.xlu0 %886
        %888 = vrot.lane.b32.xlu0 %v800, 32
        %v889 = vpop.permute.xlu0 %888
        %890 = vrot.lane.b32.xlu0 %v801, 32
        %v891 = vpop.permute.xlu0 %890
        %892 = vrot.lane.b32.xlu0 %v802, 32
        %v893 = vpop.permute.xlu0 %892
        %894 = vrot.lane.b32.xlu0 %v803, 32
        %v895 = vpop.permute.xlu0 %894
        %896 = vrot.lane.b32.xlu0 %v804, 32
        %v897 = vpop.permute.xlu0 %896
        %898 = vrot.lane.b32.xlu0 %v805, 32
        %v899 = vpop.permute.xlu0 %898
        %900 = vrot.lane.b32.xlu0 %v806, 32
        %v901 = vpop.permute.xlu0 %900
        %902 = vrot.lane.b32.xlu0 %v807, 32
        %v903 = vpop.permute.xlu0 %902
        %v920 = vsel %vm659, %v840, %v873
        %v921 = vsel %vm659, %v841, %v875
        %v922 = vsel %vm659, %v842, %v877
        %v923 = vsel %vm659, %v843, %v879
        %v924 = vsel %vm659, %v844, %v881
        %v925 = vsel %vm659, %v845, %v883
        %v926 = vsel %vm659, %v846, %v885
        %v927 = vsel %vm659, %v847, %v887
        %v928 = vsel %vm659, %v848, %v889
        %v929 = vsel %vm659, %v849, %v891
        %v930 = vsel %vm659, %v850, %v893
        %v931 = vsel %vm659, %v851, %v895
        %v932 = vsel %vm659, %v852, %v897
        %v933 = vsel %vm659, %v853, %v899
        %v934 = vsel %vm659, %v854, %v901
        %v935 = vsel %vm659, %v855, %v903
        %v936 = vpack.c.bf16 %v921, %v920
        %v937 = vpack.c.bf16 %v923, %v922
        %v938 = vpack.c.bf16 %v925, %v924
        %v939 = vpack.c.bf16 %v927, %v926
        %v940 = vpack.c.bf16 %v929, %v928
        %v941 = vpack.c.bf16 %v931, %v930
        %v942 = vpack.c.bf16 %v933, %v932
        %v943 = vpack.c.bf16 %v935, %v934
        %v944 = vld [vmem:[%s1 + $0x20] sm:$0xf]
        %v945 = vld [vmem:[%s1 + $0x24] sm:$0xf]
        %v946 = vld [vmem:[%s1 + $0x28] sm:$0xf]
        %v947 = vld [vmem:[%s1 + $0x2c] sm:$0xf]
        %v948 = vld [vmem:[%s1 + $0x30] sm:$0xf]
        %v949 = vld [vmem:[%s1 + $0x34] sm:$0xf]
        %v950 = vld [vmem:[%s1 + $0x38] sm:$0xf]
        %v951 = vld [vmem:[%s1 + $0x3c] sm:$0xf]
        %v952 = vld [vmem:[%s2 + $0x1] sm:$0x1]
        %v953 = vperm.slane %v952, 0
        %v962 = vunpack.c.l.b16 %v944
        %v963 = vunpack.c.l.b16 %v945
        %v964 = vunpack.c.l.b16 %v946
        %v965 = vunpack.c.l.b16 %v947
        %v966 = vunpack.c.l.b16 %v948
        %v967 = vunpack.c.l.b16 %v949
        %v968 = vunpack.c.l.b16 %v950
        %v969 = vunpack.c.l.b16 %v951
        %v970 = vpack.c.b16 %v963, %v962
        %v971 = vpack.c.b16 %v965, %v964
        %v972 = vpack.c.b16 %v967, %v966
        %v973 = vpack.c.b16 %v969, %v968
        %v979 = vsel %vm718, %v936, 0
        %v982 = vsel %vm718, %v937, 0
        %v985 = vsel %vm718, %v938, 0
        %v988 = vsel %vm718, %v939, 0
        %v991 = vsel %vm718, %v940, 0
        %v994 = vsel %vm718, %v941, 0
        %v997 = vsel %vm718, %v942, 0
        %v1000 = vsel %vm718, %v943, 0
        %1002 = vmatpush.bf16.msra.mxu0 0
        %1003 = vmatpush.bf16.msra.mxu0 0
        %1004 = vmatpush.bf16.msra.mxu0 0
        %1005 = vmatpush.bf16.msra.mxu0 0
        %1006 = vmatpush.bf16.msra.mxu0 %v973
        %1007 = vmatpush.bf16.msra.mxu0 %v972
        %1008 = vmatpush.bf16.msra.mxu0 %v971
        %1009 = vmatpush.bf16.msra.mxu0 %v970
        %1010 = vmatmul.bf16.gmra.mxu0 %v979
        %v1011 = vpop.f32.mrf.mxu0
        %v1012 = vadd.f32 %v953, %v1011
        %v1013 = vpop.f32.mrf.mxu0
        %v1014 = vadd.f32 %v953, %v1013
        %1015 = vmatmul.bf16.gmra.mxu0 %v982
        %v1016 = vpop.f32.mrf.mxu0
        %v1017 = vadd.f32 %v953, %v1016
        %v1018 = vpop.f32.mrf.mxu0
        %v1019 = vadd.f32 %v953, %v1018
        %1020 = vmatmul.bf16.gmra.mxu0 %v985
        %v1021 = vpop.f32.mrf.mxu0
        %v1022 = vadd.f32 %v953, %v1021
        %v1023 = vpop.f32.mrf.mxu0
        %v1024 = vadd.f32 %v953, %v1023
        %1025 = vmatmul.bf16.gmra.mxu0 %v988
        %v1026 = vpop.f32.mrf.mxu0
        %v1027 = vadd.f32 %v953, %v1026
        %v1028 = vpop.f32.mrf.mxu0
        %v1029 = vadd.f32 %v953, %v1028
        %1030 = vmatmul.bf16.gmra.mxu0 %v991
        %v1031 = vpop.f32.mrf.mxu0
        %v1032 = vadd.f32 %v953, %v1031
        %v1033 = vpop.f32.mrf.mxu0
        %v1034 = vadd.f32 %v953, %v1033
        %1035 = vmatmul.bf16.gmra.mxu0 %v994
        %v1036 = vpop.f32.mrf.mxu0
        %v1037 = vadd.f32 %v953, %v1036
        %v1038 = vpop.f32.mrf.mxu0
        %v1039 = vadd.f32 %v953, %v1038
        %1040 = vmatmul.bf16.gmra.mxu0 %v997
        %v1041 = vpop.f32.mrf.mxu0
        %v1042 = vadd.f32 %v953, %v1041
        %v1043 = vpop.f32.mrf.mxu0
        %v1044 = vadd.f32 %v953, %v1043
        %1045 = vmatmul.bf16.gmra.mxu0 %v1000
        %v1046 = vpop.f32.mrf.mxu0
        %v1047 = vadd.f32 %v953, %v1046
        %v1048 = vpop.f32.mrf.mxu0
        %v1049 = vadd.f32 %v953, %v1048
        %1050 = vdwg.mxu0
        %v1051 = vmax.f32 %v1012, 0.0
        %v1052 = vmax.f32 %v1014, 0.0
        %v1053 = vmax.f32 %v1017, 0.0
        %v1054 = vmax.f32 %v1019, 0.0
        %v1055 = vmax.f32 %v1022, 0.0
        %v1056 = vmax.f32 %v1024, 0.0
        %v1057 = vmax.f32 %v1027, 0.0
        %v1058 = vmax.f32 %v1029, 0.0
        %v1059 = vmax.f32 %v1032, 0.0
        %v1060 = vmax.f32 %v1034, 0.0
        %v1061 = vmax.f32 %v1037, 0.0
        %v1062 = vmax.f32 %v1039, 0.0
        %v1063 = vmax.f32 %v1042, 0.0
        %v1064 = vmax.f32 %v1044, 0.0
        %v1065 = vmax.f32 %v1047, 0.0
        %v1066 = vmax.f32 %v1049, 0.0
        %v1067 = vld [vmem:[%s1 + $0x40] sm:$0xf]
        %v1068 = vld [vmem:[%s1 + $0x44] sm:$0xf]
        %v1069 = vld [vmem:[%s1 + $0x48] sm:$0xf]
        %v1070 = vld [vmem:[%s1 + $0x4c] sm:$0xf]
        %v1071 = vld [vmem:[%s2 + $0x2] sm:$0x1]
        %v1072 = vpack.c.bf16 %v483, %v482
        %v1073 = vpack.c.bf16 %v485, %v484
        %v1074 = vpack.c.bf16 %v487, %v486
        %v1075 = vpack.c.bf16 %v489, %v488
        %v1076 = vpack.c.bf16 %v491, %v490
        %v1077 = vpack.c.bf16 %v493, %v492
        %v1078 = vpack.c.bf16 %v495, %v494
        %v1079 = vpack.c.bf16 %v497, %v496
        %v1080 = vperm.slane %v1071, 0
        %v1085 = vunpack.c.l.b16 %v1067
        %v1086 = vunpack.c.l.b16 %v1068
        %v1087 = vunpack.c.l.b16 %v1069
        %v1088 = vunpack.c.l.b16 %v1070
        %v1089 = vpack.c.b16 %v1086, %v1085
        %v1090 = vpack.c.b16 %v1088, %v1087
        %v1094 = vsel %vm659, %v1072, 0
        %v1097 = vsel %vm659, %v1073, 0
        %v1100 = vsel %vm659, %v1074, 0
        %v1103 = vsel %vm659, %v1075, 0
        %v1106 = vsel %vm659, %v1076, 0
        %v1109 = vsel %vm659, %v1077, 0
        %v1112 = vsel %vm659, %v1078, 0
        %v1115 = vsel %vm659, %v1079, 0
        %1117 = vmatpush.bf16.msra.mxu0 0
        %1118 = vmatpush.bf16.msra.mxu0 0
        %1119 = vmatpush.bf16.msra.mxu0 0
        %1120 = vmatpush.bf16.msra.mxu0 0
        %1121 = vmatpush.bf16.msra.mxu0 0
        %1122 = vmatpush.bf16.msra.mxu0 0
        %1123 = vmatpush.bf16.msra.mxu0 %v1090
        %1124 = vmatpush.bf16.msra.mxu0 %v1089
        %1125 = vmatmul.bf16.gmra.mxu0 %v1094
        %v1126 = vpop.f32.mrf.mxu0
        %v1127 = vadd.f32 %v1080, %v1126
        %v1128 = vpop.f32.mrf.mxu0
        %v1129 = vadd.f32 %v1080, %v1128
        %1130 = vmatmul.bf16.gmra.mxu0 %v1097
        %v1131 = vpop.f32.mrf.mxu0
        %v1132 = vadd.f32 %v1080, %v1131
        %v1133 = vpop.f32.mrf.mxu0
        %v1134 = vadd.f32 %v1080, %v1133
        %1135 = vmatmul.bf16.gmra.mxu0 %v1100
        %v1136 = vpop.f32.mrf.mxu0
        %v1137 = vadd.f32 %v1080, %v1136
        %v1138 = vpop.f32.mrf.mxu0
        %v1139 = vadd.f32 %v1080, %v1138
        %1140 = vmatmul.bf16.gmra.mxu0 %v1103
        %v1141 = vpop.f32.mrf.mxu0
        %v1142 = vadd.f32 %v1080, %v1141
        %v1143 = vpop.f32.mrf.mxu0
        %v1144 = vadd.f32 %v1080, %v1143
        %1145 = vmatmul.bf16.gmra.mxu0 %v1106
        %v1146 = vpop.f32.mrf.mxu0
        %v1147 = vadd.f32 %v1080, %v1146
        %v1148 = vpop.f32.mrf.mxu0
        %v1149 = vadd.f32 %v1080, %v1148
        %1150 = vmatmul.bf16.gmra.mxu0 %v1109
        %v1151 = vpop.f32.mrf.mxu0
        %v1152 = vadd.f32 %v1080, %v1151
        %v1153 = vpop.f32.mrf.mxu0
        %v1154 = vadd.f32 %v1080, %v1153
        %1155 = vmatmul.bf16.gmra.mxu0 %v1112
        %v1156 = vpop.f32.mrf.mxu0
        %v1157 = vadd.f32 %v1080, %v1156
        %v1158 = vpop.f32.mrf.mxu0
        %v1159 = vadd.f32 %v1080, %v1158
        %1160 = vmatmul.bf16.gmra.mxu0 %v1115
        %v1161 = vpop.f32.mrf.mxu0
        %v1162 = vadd.f32 %v1080, %v1161
        %v1163 = vpop.f32.mrf.mxu0
        %v1164 = vadd.f32 %v1080, %v1163
        %1165 = vdwg.mxu0
        %v1166 = vadd.f32 %v1051, %v1127
        %v1167 = vadd.f32 %v1052, %v1129
        %v1168 = vadd.f32 %v1053, %v1132
        %v1169 = vadd.f32 %v1054, %v1134
        %v1170 = vadd.f32 %v1055, %v1137
        %v1171 = vadd.f32 %v1056, %v1139
        %v1172 = vadd.f32 %v1057, %v1142
        %v1173 = vadd.f32 %v1058, %v1144
        %v1174 = vadd.f32 %v1059, %v1147
        %v1175 = vadd.f32 %v1060, %v1149
        %v1176 = vadd.f32 %v1061, %v1152
        %v1177 = vadd.f32 %v1062, %v1154
        %v1178 = vadd.f32 %v1063, %v1157
        %v1179 = vadd.f32 %v1064, %v1159
        %v1180 = vadd.f32 %v1065, %v1162
        %v1181 = vadd.f32 %v1066, %v1164
        %v1182 = vmax.f32 %v1166, 0.0
        %v1183 = vmax.f32 %v1167, 0.0
        %v1184 = vmax.f32 %v1168, 0.0
        %v1185 = vmax.f32 %v1169, 0.0
        %v1186 = vmax.f32 %v1170, 0.0
        %v1187 = vmax.f32 %v1171, 0.0
        %v1188 = vmax.f32 %v1172, 0.0
        %v1189 = vmax.f32 %v1173, 0.0
        %v1190 = vmax.f32 %v1174, 0.0
        %v1191 = vmax.f32 %v1175, 0.0
        %v1192 = vmax.f32 %v1176, 0.0
        %v1193 = vmax.f32 %v1177, 0.0
        %v1194 = vmax.f32 %v1178, 0.0
        %v1195 = vmax.f32 %v1179, 0.0
        %v1196 = vmax.f32 %v1180, 0.0
        %v1197 = vmax.f32 %v1181, 0.0
        %vm1198 = vcmp.ge.s32.totalorder %v365, 2
        %vm1199 = vcmp.ge.s32.totalorder %v366, 2
        %vm1200 = vcmp.ge.s32.totalorder %v367, 2
        %vm1201 = vcmp.ge.s32.totalorder %v368, 2
        %vm1202 = vcmp.ge.s32.totalorder %v369, 2
        %vm1203 = vcmp.ge.s32.totalorder %v370, 2
        %vm1204 = vcmp.ge.s32.totalorder %v371, 2
        %vm1205 = vcmp.ge.s32.totalorder %v372, 2
        %vm1206 = vcmp.ge.s32.totalorder %v373, 2
        %vm1207 = vcmp.ge.s32.totalorder %v374, 2
        %vm1208 = vcmp.ge.s32.totalorder %v375, 2
        %vm1209 = vcmp.ge.s32.totalorder %v376, 2
        %vm1210 = vcmp.ge.s32.totalorder %v377, 2
        %vm1211 = vcmp.ge.s32.totalorder %v378, 2
        %vm1212 = vcmp.ge.s32.totalorder %v379, 2
        %vm1213 = vcmp.ge.s32.totalorder %v380, 2
        %v1214 = vrot.slane %v1182, 6
        %v1215 = vrot.slane %v1183, 6
        %v1216 = vrot.slane %v1184, 6
        %v1217 = vrot.slane %v1185, 6
        %v1218 = vrot.slane %v1186, 6
        %v1219 = vrot.slane %v1187, 6
        %v1220 = vrot.slane %v1188, 6
        %v1221 = vrot.slane %v1189, 6
        %v1222 = vrot.slane %v1190, 6
        %v1223 = vrot.slane %v1191, 6
        %v1224 = vrot.slane %v1192, 6
        %v1225 = vrot.slane %v1193, 6
        %v1226 = vrot.slane %v1194, 6
        %v1227 = vrot.slane %v1195, 6
        %v1228 = vrot.slane %v1196, 6
        %v1229 = vrot.slane %v1197, 6
        %vm1230 = vcmp.lt.s32.totalorder %v173, 2
        %v1231 = vsel %vm1230, %v1228, %v1229
        %v1232 = vsel %vm1230, %v1227, %v1228
        %v1233 = vsel %vm1230, %v1226, %v1227
        %v1234 = vsel %vm1230, %v1225, %v1226
        %v1235 = vsel %vm1230, %v1224, %v1225
        %v1236 = vsel %vm1230, %v1223, %v1224
        %v1237 = vsel %vm1230, %v1222, %v1223
        %v1238 = vsel %vm1230, %v1221, %v1222
        %v1239 = vsel %vm1230, %v1220, %v1221
        %v1240 = vsel %vm1230, %v1219, %v1220
        %v1241 = vsel %vm1230, %v1218, %v1219
        %v1242 = vsel %vm1230, %v1217, %v1218
        %v1243 = vsel %vm1230, %v1216, %v1217
        %v1244 = vsel %vm1230, %v1215, %v1216
        %v1245 = vsel %vm1230, %v1214, %v1215
        %v1246 = vsel %vm1230, %v1229, %v1214
        %v1247 = vsel %vm1198, 1, 0
        %v1248 = vsel %vm1199, 1, 0
        %v1249 = vsel %vm1200, 1, 0
        %v1250 = vsel %vm1201, 1, 0
        %v1251 = vsel %vm1202, 1, 0
        %v1252 = vsel %vm1203, 1, 0
        %v1253 = vsel %vm1204, 1, 0
        %v1254 = vsel %vm1205, 1, 0
        %v1255 = vsel %vm1206, 1, 0
        %v1256 = vsel %vm1207, 1, 0
        %v1257 = vsel %vm1208, 1, 0
        %v1258 = vsel %vm1209, 1, 0
        %v1259 = vsel %vm1210, 1, 0
        %v1260 = vsel %vm1211, 1, 0
        %v1261 = vsel %vm1212, 1, 0
        %v1262 = vsel %vm1213, 1, 0
        %vm1263 = vcmp.eq.s32.totalorder %v1247, 1
        %vm1264 = vcmp.eq.s32.totalorder %v1248, 1
        %vm1265 = vcmp.eq.s32.totalorder %v1249, 1
        %vm1266 = vcmp.eq.s32.totalorder %v1250, 1
        %vm1267 = vcmp.eq.s32.totalorder %v1251, 1
        %vm1268 = vcmp.eq.s32.totalorder %v1252, 1
        %vm1269 = vcmp.eq.s32.totalorder %v1253, 1
        %vm1270 = vcmp.eq.s32.totalorder %v1254, 1
        %vm1271 = vcmp.eq.s32.totalorder %v1255, 1
        %vm1272 = vcmp.eq.s32.totalorder %v1256, 1
        %vm1273 = vcmp.eq.s32.totalorder %v1257, 1
        %vm1274 = vcmp.eq.s32.totalorder %v1258, 1
        %vm1275 = vcmp.eq.s32.totalorder %v1259, 1
        %vm1276 = vcmp.eq.s32.totalorder %v1260, 1
        %vm1277 = vcmp.eq.s32.totalorder %v1261, 1
        %vm1278 = vcmp.eq.s32.totalorder %v1262, 1
        %v1279 = vsel %vm1263, %v1246, 0.0
        %v1280 = vsel %vm1264, %v1245, 0.0
        %v1281 = vsel %vm1265, %v1244, 0.0
        %v1282 = vsel %vm1266, %v1243, 0.0
        %v1283 = vsel %vm1267, %v1242, 0.0
        %v1284 = vsel %vm1268, %v1241, 0.0
        %v1285 = vsel %vm1269, %v1240, 0.0
        %v1286 = vsel %vm1270, %v1239, 0.0
        %v1287 = vsel %vm1271, %v1238, 0.0
        %v1288 = vsel %vm1272, %v1237, 0.0
        %v1289 = vsel %vm1273, %v1236, 0.0
        %v1290 = vsel %vm1274, %v1235, 0.0
        %v1291 = vsel %vm1275, %v1234, 0.0
        %v1292 = vsel %vm1276, %v1233, 0.0
        %v1293 = vsel %vm1277, %v1232, 0.0
        %v1294 = vsel %vm1278, %v1231, 0.0
        %1311 = vrot.lane.b32.xlu0 %v1182, 32
        %v1312 = vpop.permute.xlu0 %1311
        %1313 = vrot.lane.b32.xlu0 %v1183, 32
        %v1314 = vpop.permute.xlu0 %1313
        %1315 = vrot.lane.b32.xlu0 %v1184, 32
        %v1316 = vpop.permute.xlu0 %1315
        %1317 = vrot.lane.b32.xlu0 %v1185, 32
        %v1318 = vpop.permute.xlu0 %1317
        %1319 = vrot.lane.b32.xlu0 %v1186, 32
        %v1320 = vpop.permute.xlu0 %1319
        %1321 = vrot.lane.b32.xlu0 %v1187, 32
        %v1322 = vpop.permute.xlu0 %1321
        %1323 = vrot.lane.b32.xlu0 %v1188, 32
        %v1324 = vpop.permute.xlu0 %1323
        %1325 = vrot.lane.b32.xlu0 %v1189, 32
        %v1326 = vpop.permute.xlu0 %1325
        %1327 = vrot.lane.b32.xlu0 %v1190, 32
        %v1328 = vpop.permute.xlu0 %1327
        %1329 = vrot.lane.b32.xlu0 %v1191, 32
        %v1330 = vpop.permute.xlu0 %1329
        %1331 = vrot.lane.b32.xlu0 %v1192, 32
        %v1332 = vpop.permute.xlu0 %1331
        %1333 = vrot.lane.b32.xlu0 %v1193, 32
        %v1334 = vpop.permute.xlu0 %1333
        %1335 = vrot.lane.b32.xlu0 %v1194, 32
        %v1336 = vpop.permute.xlu0 %1335
        %1337 = vrot.lane.b32.xlu0 %v1195, 32
        %v1338 = vpop.permute.xlu0 %1337
        %1339 = vrot.lane.b32.xlu0 %v1196, 32
        %v1340 = vpop.permute.xlu0 %1339
        %1341 = vrot.lane.b32.xlu0 %v1197, 32
        %v1342 = vpop.permute.xlu0 %1341
        %v1359 = vsel %vm659, %v1279, %v1312
        %v1360 = vsel %vm659, %v1280, %v1314
        %v1361 = vsel %vm659, %v1281, %v1316
        %v1362 = vsel %vm659, %v1282, %v1318
        %v1363 = vsel %vm659, %v1283, %v1320
        %v1364 = vsel %vm659, %v1284, %v1322
        %v1365 = vsel %vm659, %v1285, %v1324
        %v1366 = vsel %vm659, %v1286, %v1326
        %v1367 = vsel %vm659, %v1287, %v1328
        %v1368 = vsel %vm659, %v1288, %v1330
        %v1369 = vsel %vm659, %v1289, %v1332
        %v1370 = vsel %vm659, %v1290, %v1334
        %v1371 = vsel %vm659, %v1291, %v1336
        %v1372 = vsel %vm659, %v1292, %v1338
        %v1373 = vsel %vm659, %v1293, %v1340
        %v1374 = vsel %vm659, %v1294, %v1342
        %v1375 = vpack.c.bf16 %v1360, %v1359
        %v1376 = vpack.c.bf16 %v1362, %v1361
        %v1377 = vpack.c.bf16 %v1364, %v1363
        %v1378 = vpack.c.bf16 %v1366, %v1365
        %v1379 = vpack.c.bf16 %v1368, %v1367
        %v1380 = vpack.c.bf16 %v1370, %v1369
        %v1381 = vpack.c.bf16 %v1372, %v1371
        %v1382 = vpack.c.bf16 %v1374, %v1373
        %v1383 = vld [vmem:[%s1 + $0x50] sm:$0xf]
        %v1384 = vld [vmem:[%s1 + $0x54] sm:$0xf]
        %v1385 = vld [vmem:[%s1 + $0x58] sm:$0xf]
        %v1386 = vld [vmem:[%s1 + $0x5c] sm:$0xf]
        %v1387 = vld [vmem:[%s1 + $0x60] sm:$0xf]
        %v1388 = vld [vmem:[%s1 + $0x64] sm:$0xf]
        %v1389 = vld [vmem:[%s1 + $0x68] sm:$0xf]
        %v1390 = vld [vmem:[%s1 + $0x6c] sm:$0xf]
        %v1391 = vld [vmem:[%s2 + $0x3] sm:$0x1]
        %v1392 = vperm.slane %v1391, 0
        %v1401 = vunpack.c.l.b16 %v1383
        %v1402 = vunpack.c.l.b16 %v1384
        %v1403 = vunpack.c.l.b16 %v1385
        %v1404 = vunpack.c.l.b16 %v1386
        %v1405 = vunpack.c.l.b16 %v1387
        %v1406 = vunpack.c.l.b16 %v1388
        %v1407 = vunpack.c.l.b16 %v1389
        %v1408 = vunpack.c.l.b16 %v1390
        %v1409 = vpack.c.b16 %v1402, %v1401
        %v1410 = vpack.c.b16 %v1404, %v1403
        %v1411 = vpack.c.b16 %v1406, %v1405
        %v1412 = vpack.c.b16 %v1408, %v1407
        %v1418 = vsel %vm718, %v1375, 0
        %v1421 = vsel %vm718, %v1376, 0
        %v1424 = vsel %vm718, %v1377, 0
        %v1427 = vsel %vm718, %v1378, 0
        %v1430 = vsel %vm718, %v1379, 0
        %v1433 = vsel %vm718, %v1380, 0
        %v1436 = vsel %vm718, %v1381, 0
        %v1439 = vsel %vm718, %v1382, 0
        %1441 = vmatpush.bf16.msra.mxu0 0
        %1442 = vmatpush.bf16.msra.mxu0 0
        %1443 = vmatpush.bf16.msra.mxu0 0
        %1444 = vmatpush.bf16.msra.mxu0 0
        %1445 = vmatpush.bf16.msra.mxu0 %v1412
        %1446 = vmatpush.bf16.msra.mxu0 %v1411
        %1447 = vmatpush.bf16.msra.mxu0 %v1410
        %1448 = vmatpush.bf16.msra.mxu0 %v1409
        %1449 = vmatmul.bf16.gmra.mxu0 %v1418
        %v1450 = vpop.f32.mrf.mxu0
        %v1451 = vadd.f32 %v1392, %v1450
        %v1452 = vpop.f32.mrf.mxu0
        %v1453 = vadd.f32 %v1392, %v1452
        %1454 = vmatmul.bf16.gmra.mxu0 %v1421
        %v1455 = vpop.f32.mrf.mxu0
        %v1456 = vadd.f32 %v1392, %v1455
        %v1457 = vpop.f32.mrf.mxu0
        %v1458 = vadd.f32 %v1392, %v1457
        %1459 = vmatmul.bf16.gmra.mxu0 %v1424
        %v1460 = vpop.f32.mrf.mxu0
        %v1461 = vadd.f32 %v1392, %v1460
        %v1462 = vpop.f32.mrf.mxu0
        %v1463 = vadd.f32 %v1392, %v1462
        %1464 = vmatmul.bf16.gmra.mxu0 %v1427
        %v1465 = vpop.f32.mrf.mxu0
        %v1466 = vadd.f32 %v1392, %v1465
        %v1467 = vpop.f32.mrf.mxu0
        %v1468 = vadd.f32 %v1392, %v1467
        %1469 = vmatmul.bf16.gmra.mxu0 %v1430
        %v1470 = vpop.f32.mrf.mxu0
        %v1471 = vadd.f32 %v1392, %v1470
        %v1472 = vpop.f32.mrf.mxu0
        %v1473 = vadd.f32 %v1392, %v1472
        %1474 = vmatmul.bf16.gmra.mxu0 %v1433
        %v1475 = vpop.f32.mrf.mxu0
        %v1476 = vadd.f32 %v1392, %v1475
        %v1477 = vpop.f32.mrf.mxu0
        %v1478 = vadd.f32 %v1392, %v1477
        %1479 = vmatmul.bf16.gmra.mxu0 %v1436
        %v1480 = vpop.f32.mrf.mxu0
        %v1481 = vadd.f32 %v1392, %v1480
        %v1482 = vpop.f32.mrf.mxu0
        %v1483 = vadd.f32 %v1392, %v1482
        %1484 = vmatmul.bf16.gmra.mxu0 %v1439
        %v1485 = vpop.f32.mrf.mxu0
        %v1486 = vadd.f32 %v1392, %v1485
        %v1487 = vpop.f32.mrf.mxu0
        %v1488 = vadd.f32 %v1392, %v1487
        %1489 = vdwg.mxu0
        %v1490 = vmax.f32 %v1451, 0.0
        %v1491 = vmax.f32 %v1453, 0.0
        %v1492 = vmax.f32 %v1456, 0.0
        %v1493 = vmax.f32 %v1458, 0.0
        %v1494 = vmax.f32 %v1461, 0.0
        %v1495 = vmax.f32 %v1463, 0.0
        %v1496 = vmax.f32 %v1466, 0.0
        %v1497 = vmax.f32 %v1468, 0.0
        %v1498 = vmax.f32 %v1471, 0.0
        %v1499 = vmax.f32 %v1473, 0.0
        %v1500 = vmax.f32 %v1476, 0.0
        %v1501 = vmax.f32 %v1478, 0.0
        %v1502 = vmax.f32 %v1481, 0.0
        %v1503 = vmax.f32 %v1483, 0.0
        %v1504 = vmax.f32 %v1486, 0.0
        %v1505 = vmax.f32 %v1488, 0.0
        %v1506 = vrot.slane %v1490, 6
        %v1507 = vrot.slane %v1491, 6
        %v1508 = vrot.slane %v1492, 6
        %v1509 = vrot.slane %v1493, 6
        %v1510 = vrot.slane %v1494, 6
        %v1511 = vrot.slane %v1495, 6
        %v1512 = vrot.slane %v1496, 6
        %v1513 = vrot.slane %v1497, 6
        %v1514 = vrot.slane %v1498, 6
        %v1515 = vrot.slane %v1499, 6
        %v1516 = vrot.slane %v1500, 6
        %v1517 = vrot.slane %v1501, 6
        %v1518 = vrot.slane %v1502, 6
        %v1519 = vrot.slane %v1503, 6
        %v1520 = vrot.slane %v1504, 6
        %v1521 = vrot.slane %v1505, 6
        %v1522 = vsel %vm1230, %v1520, %v1521
        %v1523 = vsel %vm1230, %v1519, %v1520
        %v1524 = vsel %vm1230, %v1518, %v1519
        %v1525 = vsel %vm1230, %v1517, %v1518
        %v1526 = vsel %vm1230, %v1516, %v1517
        %v1527 = vsel %vm1230, %v1515, %v1516
        %v1528 = vsel %vm1230, %v1514, %v1515
        %v1529 = vsel %vm1230, %v1513, %v1514
        %v1530 = vsel %vm1230, %v1512, %v1513
        %v1531 = vsel %vm1230, %v1511, %v1512
        %v1532 = vsel %vm1230, %v1510, %v1511
        %v1533 = vsel %vm1230, %v1509, %v1510
        %v1534 = vsel %vm1230, %v1508, %v1509
        %v1535 = vsel %vm1230, %v1507, %v1508
        %v1536 = vsel %vm1230, %v1506, %v1507
        %v1537 = vsel %vm1230, %v1521, %v1506
        %v1538 = vsel %vm1263, %v1537, 0.0
        %v1539 = vsel %vm1264, %v1536, 0.0
        %v1540 = vsel %vm1265, %v1535, 0.0
        %v1541 = vsel %vm1266, %v1534, 0.0
        %v1542 = vsel %vm1267, %v1533, 0.0
        %v1543 = vsel %vm1268, %v1532, 0.0
        %v1544 = vsel %vm1269, %v1531, 0.0
        %v1545 = vsel %vm1270, %v1530, 0.0
        %v1546 = vsel %vm1271, %v1529, 0.0
        %v1547 = vsel %vm1272, %v1528, 0.0
        %v1548 = vsel %vm1273, %v1527, 0.0
        %v1549 = vsel %vm1274, %v1526, 0.0
        %v1550 = vsel %vm1275, %v1525, 0.0
        %v1551 = vsel %vm1276, %v1524, 0.0
        %v1552 = vsel %vm1277, %v1523, 0.0
        %v1553 = vsel %vm1278, %v1522, 0.0
        %1570 = vrot.lane.b32.xlu0 %v1490, 32
        %v1571 = vpop.permute.xlu0 %1570
        %1572 = vrot.lane.b32.xlu0 %v1491, 32
        %v1573 = vpop.permute.xlu0 %1572
        %1574 = vrot.lane.b32.xlu0 %v1492, 32
        %v1575 = vpop.permute.xlu0 %1574
        %1576 = vrot.lane.b32.xlu0 %v1493, 32
        %v1577 = vpop.permute.xlu0 %1576
        %1578 = vrot.lane.b32.xlu0 %v1494, 32
        %v1579 = vpop.permute.xlu0 %1578
        %1580 = vrot.lane.b32.xlu0 %v1495, 32
        %v1581 = vpop.permute.xlu0 %1580
        %1582 = vrot.lane.b32.xlu0 %v1496, 32
        %v1583 = vpop.permute.xlu0 %1582
        %1584 = vrot.lane.b32.xlu0 %v1497, 32
        %v1585 = vpop.permute.xlu0 %1584
        %1586 = vrot.lane.b32.xlu0 %v1498, 32
        %v1587 = vpop.permute.xlu0 %1586
        %1588 = vrot.lane.b32.xlu0 %v1499, 32
        %v1589 = vpop.permute.xlu0 %1588
        %1590 = vrot.lane.b32.xlu0 %v1500, 32
        %v1591 = vpop.permute.xlu0 %1590
        %1592 = vrot.lane.b32.xlu0 %v1501, 32
        %v1593 = vpop.permute.xlu0 %1592
        %1594 = vrot.lane.b32.xlu0 %v1502, 32
        %v1595 = vpop.permute.xlu0 %1594
        %1596 = vrot.lane.b32.xlu0 %v1503, 32
        %v1597 = vpop.permute.xlu0 %1596
        %1598 = vrot.lane.b32.xlu0 %v1504, 32
        %v1599 = vpop.permute.xlu0 %1598
        %1600 = vrot.lane.b32.xlu0 %v1505, 32
        %v1601 = vpop.permute.xlu0 %1600
        %v1618 = vsel %vm659, %v1538, %v1571
        %v1619 = vsel %vm659, %v1539, %v1573
        %v1620 = vsel %vm659, %v1540, %v1575
        %v1621 = vsel %vm659, %v1541, %v1577
        %v1622 = vsel %vm659, %v1542, %v1579
        %v1623 = vsel %vm659, %v1543, %v1581
        %v1624 = vsel %vm659, %v1544, %v1583
        %v1625 = vsel %vm659, %v1545, %v1585
        %v1626 = vsel %vm659, %v1546, %v1587
        %v1627 = vsel %vm659, %v1547, %v1589
        %v1628 = vsel %vm659, %v1548, %v1591
        %v1629 = vsel %vm659, %v1549, %v1593
        %v1630 = vsel %vm659, %v1550, %v1595
        %v1631 = vsel %vm659, %v1551, %v1597
        %v1632 = vsel %vm659, %v1552, %v1599
        %v1633 = vsel %vm659, %v1553, %v1601
        %v1634 = vpack.c.bf16 %v1619, %v1618
        %v1635 = vpack.c.bf16 %v1621, %v1620
        %v1636 = vpack.c.bf16 %v1623, %v1622
        %v1637 = vpack.c.bf16 %v1625, %v1624
        %v1638 = vpack.c.bf16 %v1627, %v1626
        %v1639 = vpack.c.bf16 %v1629, %v1628
        %v1640 = vpack.c.bf16 %v1631, %v1630
        %v1641 = vpack.c.bf16 %v1633, %v1632
        %v1642 = vld [vmem:[%s1 + $0x70] sm:$0xf]
        %v1643 = vld [vmem:[%s1 + $0x74] sm:$0xf]
        %v1644 = vld [vmem:[%s1 + $0x78] sm:$0xf]
        %v1645 = vld [vmem:[%s1 + $0x7c] sm:$0xf]
        %v1646 = vld [vmem:[%s1 + $0x80] sm:$0xf]
        %v1647 = vld [vmem:[%s1 + $0x84] sm:$0xf]
        %v1648 = vld [vmem:[%s1 + $0x88] sm:$0xf]
        %v1649 = vld [vmem:[%s1 + $0x8c] sm:$0xf]
        %v1650 = vld [vmem:[%s2 + $0x4] sm:$0x1]
        %v1651 = vperm.slane %v1650, 0
        %v1660 = vunpack.c.l.b16 %v1642
        %v1661 = vunpack.c.l.b16 %v1643
        %v1662 = vunpack.c.l.b16 %v1644
        %v1663 = vunpack.c.l.b16 %v1645
        %v1664 = vunpack.c.l.b16 %v1646
        %v1665 = vunpack.c.l.b16 %v1647
        %v1666 = vunpack.c.l.b16 %v1648
        %v1667 = vunpack.c.l.b16 %v1649
        %v1668 = vpack.c.b16 %v1661, %v1660
        %v1669 = vpack.c.b16 %v1663, %v1662
        %v1670 = vpack.c.b16 %v1665, %v1664
        %v1671 = vpack.c.b16 %v1667, %v1666
        %v1677 = vsel %vm718, %v1634, 0
        %v1680 = vsel %vm718, %v1635, 0
        %v1683 = vsel %vm718, %v1636, 0
        %v1686 = vsel %vm718, %v1637, 0
        %v1689 = vsel %vm718, %v1638, 0
        %v1692 = vsel %vm718, %v1639, 0
        %v1695 = vsel %vm718, %v1640, 0
        %v1698 = vsel %vm718, %v1641, 0
        %1700 = vmatpush.bf16.msra.mxu0 0
        %1701 = vmatpush.bf16.msra.mxu0 0
        %1702 = vmatpush.bf16.msra.mxu0 0
        %1703 = vmatpush.bf16.msra.mxu0 0
        %1704 = vmatpush.bf16.msra.mxu0 %v1671
        %1705 = vmatpush.bf16.msra.mxu0 %v1670
        %1706 = vmatpush.bf16.msra.mxu0 %v1669
        %1707 = vmatpush.bf16.msra.mxu0 %v1668
        %1708 = vmatmul.bf16.gmra.mxu0 %v1677
        %v1709 = vpop.f32.mrf.mxu0
        %v1710 = vadd.f32 %v1651, %v1709
        %v1711 = vpop.f32.mrf.mxu0
        %v1712 = vadd.f32 %v1651, %v1711
        %1713 = vmatmul.bf16.gmra.mxu0 %v1680
        %v1714 = vpop.f32.mrf.mxu0
        %v1715 = vadd.f32 %v1651, %v1714
        %v1716 = vpop.f32.mrf.mxu0
        %v1717 = vadd.f32 %v1651, %v1716
        %1718 = vmatmul.bf16.gmra.mxu0 %v1683
        %v1719 = vpop.f32.mrf.mxu0
        %v1720 = vadd.f32 %v1651, %v1719
        %v1721 = vpop.f32.mrf.mxu0
        %v1722 = vadd.f32 %v1651, %v1721
        %1723 = vmatmul.bf16.gmra.mxu0 %v1686
        %v1724 = vpop.f32.mrf.mxu0
        %v1725 = vadd.f32 %v1651, %v1724
        %v1726 = vpop.f32.mrf.mxu0
        %v1727 = vadd.f32 %v1651, %v1726
        %1728 = vmatmul.bf16.gmra.mxu0 %v1689
        %v1729 = vpop.f32.mrf.mxu0
        %v1730 = vadd.f32 %v1651, %v1729
        %v1731 = vpop.f32.mrf.mxu0
        %v1732 = vadd.f32 %v1651, %v1731
        %1733 = vmatmul.bf16.gmra.mxu0 %v1692
        %v1734 = vpop.f32.mrf.mxu0
        %v1735 = vadd.f32 %v1651, %v1734
        %v1736 = vpop.f32.mrf.mxu0
        %v1737 = vadd.f32 %v1651, %v1736
        %1738 = vmatmul.bf16.gmra.mxu0 %v1695
        %v1739 = vpop.f32.mrf.mxu0
        %v1740 = vadd.f32 %v1651, %v1739
        %v1741 = vpop.f32.mrf.mxu0
        %v1742 = vadd.f32 %v1651, %v1741
        %1743 = vmatmul.bf16.gmra.mxu0 %v1698
        %v1744 = vpop.f32.mrf.mxu0
        %v1745 = vadd.f32 %v1651, %v1744
        %v1746 = vpop.f32.mrf.mxu0
        %v1747 = vadd.f32 %v1651, %v1746
        %1748 = vdwg.mxu0
        %v1749 = vmax.f32 %v1710, 0.0
        %v1750 = vmax.f32 %v1712, 0.0
        %v1751 = vmax.f32 %v1715, 0.0
        %v1752 = vmax.f32 %v1717, 0.0
        %v1753 = vmax.f32 %v1720, 0.0
        %v1754 = vmax.f32 %v1722, 0.0
        %v1755 = vmax.f32 %v1725, 0.0
        %v1756 = vmax.f32 %v1727, 0.0
        %v1757 = vmax.f32 %v1730, 0.0
        %v1758 = vmax.f32 %v1732, 0.0
        %v1759 = vmax.f32 %v1735, 0.0
        %v1760 = vmax.f32 %v1737, 0.0
        %v1761 = vmax.f32 %v1740, 0.0
        %v1762 = vmax.f32 %v1742, 0.0
        %v1763 = vmax.f32 %v1745, 0.0
        %v1764 = vmax.f32 %v1747, 0.0
        %v1765 = vadd.f32 %v1749, %v1182
        %v1766 = vadd.f32 %v1750, %v1183
        %v1767 = vadd.f32 %v1751, %v1184
        %v1768 = vadd.f32 %v1752, %v1185
        %v1769 = vadd.f32 %v1753, %v1186
        %v1770 = vadd.f32 %v1754, %v1187
        %v1771 = vadd.f32 %v1755, %v1188
        %v1772 = vadd.f32 %v1756, %v1189
        %v1773 = vadd.f32 %v1757, %v1190
        %v1774 = vadd.f32 %v1758, %v1191
        %v1775 = vadd.f32 %v1759, %v1192
        %v1776 = vadd.f32 %v1760, %v1193
        %v1777 = vadd.f32 %v1761, %v1194
        %v1778 = vadd.f32 %v1762, %v1195
        %v1779 = vadd.f32 %v1763, %v1196
        %v1780 = vadd.f32 %v1764, %v1197
        %v1781 = vmax.f32 %v1765, 0.0
        %v1782 = vmax.f32 %v1766, 0.0
        %v1783 = vmax.f32 %v1767, 0.0
        %v1784 = vmax.f32 %v1768, 0.0
        %v1785 = vmax.f32 %v1769, 0.0
        %v1786 = vmax.f32 %v1770, 0.0
        %v1787 = vmax.f32 %v1771, 0.0
        %v1788 = vmax.f32 %v1772, 0.0
        %v1789 = vmax.f32 %v1773, 0.0
        %v1790 = vmax.f32 %v1774, 0.0
        %v1791 = vmax.f32 %v1775, 0.0
        %v1792 = vmax.f32 %v1776, 0.0
        %v1793 = vmax.f32 %v1777, 0.0
        %v1794 = vmax.f32 %v1778, 0.0
        %v1795 = vmax.f32 %v1779, 0.0
        %v1796 = vmax.f32 %v1780, 0.0
        %vm1797 = vcmp.ge.s32.totalorder %v365, 4
        %vm1798 = vcmp.ge.s32.totalorder %v366, 4
        %vm1799 = vcmp.ge.s32.totalorder %v367, 4
        %vm1800 = vcmp.ge.s32.totalorder %v368, 4
        %vm1801 = vcmp.ge.s32.totalorder %v369, 4
        %vm1802 = vcmp.ge.s32.totalorder %v370, 4
        %vm1803 = vcmp.ge.s32.totalorder %v371, 4
        %vm1804 = vcmp.ge.s32.totalorder %v372, 4
        %vm1805 = vcmp.ge.s32.totalorder %v373, 4
        %vm1806 = vcmp.ge.s32.totalorder %v374, 4
        %vm1807 = vcmp.ge.s32.totalorder %v375, 4
        %vm1808 = vcmp.ge.s32.totalorder %v376, 4
        %vm1809 = vcmp.ge.s32.totalorder %v377, 4
        %vm1810 = vcmp.ge.s32.totalorder %v378, 4
        %vm1811 = vcmp.ge.s32.totalorder %v379, 4
        %vm1812 = vcmp.ge.s32.totalorder %v380, 4
        %v1813 = vrot.slane %v1781, 4
        %v1814 = vrot.slane %v1782, 4
        %v1815 = vrot.slane %v1783, 4
        %v1816 = vrot.slane %v1784, 4
        %v1817 = vrot.slane %v1785, 4
        %v1818 = vrot.slane %v1786, 4
        %v1819 = vrot.slane %v1787, 4
        %v1820 = vrot.slane %v1788, 4
        %v1821 = vrot.slane %v1789, 4
        %v1822 = vrot.slane %v1790, 4
        %v1823 = vrot.slane %v1791, 4
        %v1824 = vrot.slane %v1792, 4
        %v1825 = vrot.slane %v1793, 4
        %v1826 = vrot.slane %v1794, 4
        %v1827 = vrot.slane %v1795, 4
        %v1828 = vrot.slane %v1796, 4
        %vm1829 = vcmp.lt.s32.totalorder %v173, 4
        %v1830 = vsel %vm1829, %v1827, %v1828
        %v1831 = vsel %vm1829, %v1826, %v1827
        %v1832 = vsel %vm1829, %v1825, %v1826
        %v1833 = vsel %vm1829, %v1824, %v1825
        %v1834 = vsel %vm1829, %v1823, %v1824
        %v1835 = vsel %vm1829, %v1822, %v1823
        %v1836 = vsel %vm1829, %v1821, %v1822
        %v1837 = vsel %vm1829, %v1820, %v1821
        %v1838 = vsel %vm1829, %v1819, %v1820
        %v1839 = vsel %vm1829, %v1818, %v1819
        %v1840 = vsel %vm1829, %v1817, %v1818
        %v1841 = vsel %vm1829, %v1816, %v1817
        %v1842 = vsel %vm1829, %v1815, %v1816
        %v1843 = vsel %vm1829, %v1814, %v1815
        %v1844 = vsel %vm1829, %v1813, %v1814
        %v1845 = vsel %vm1829, %v1828, %v1813
        %v1846 = vsel %vm1797, 1, 0
        %v1847 = vsel %vm1798, 1, 0
        %v1848 = vsel %vm1799, 1, 0
        %v1849 = vsel %vm1800, 1, 0
        %v1850 = vsel %vm1801, 1, 0
        %v1851 = vsel %vm1802, 1, 0
        %v1852 = vsel %vm1803, 1, 0
        %v1853 = vsel %vm1804, 1, 0
        %v1854 = vsel %vm1805, 1, 0
        %v1855 = vsel %vm1806, 1, 0
        %v1856 = vsel %vm1807, 1, 0
        %v1857 = vsel %vm1808, 1, 0
        %v1858 = vsel %vm1809, 1, 0
        %v1859 = vsel %vm1810, 1, 0
        %v1860 = vsel %vm1811, 1, 0
        %v1861 = vsel %vm1812, 1, 0
        %vm1862 = vcmp.eq.s32.totalorder %v1846, 1
        %vm1863 = vcmp.eq.s32.totalorder %v1847, 1
        %vm1864 = vcmp.eq.s32.totalorder %v1848, 1
        %vm1865 = vcmp.eq.s32.totalorder %v1849, 1
        %vm1866 = vcmp.eq.s32.totalorder %v1850, 1
        %vm1867 = vcmp.eq.s32.totalorder %v1851, 1
        %vm1868 = vcmp.eq.s32.totalorder %v1852, 1
        %vm1869 = vcmp.eq.s32.totalorder %v1853, 1
        %vm1870 = vcmp.eq.s32.totalorder %v1854, 1
        %vm1871 = vcmp.eq.s32.totalorder %v1855, 1
        %vm1872 = vcmp.eq.s32.totalorder %v1856, 1
        %vm1873 = vcmp.eq.s32.totalorder %v1857, 1
        %vm1874 = vcmp.eq.s32.totalorder %v1858, 1
        %vm1875 = vcmp.eq.s32.totalorder %v1859, 1
        %vm1876 = vcmp.eq.s32.totalorder %v1860, 1
        %vm1877 = vcmp.eq.s32.totalorder %v1861, 1
        %v1878 = vsel %vm1862, %v1845, 0.0
        %v1879 = vsel %vm1863, %v1844, 0.0
        %v1880 = vsel %vm1864, %v1843, 0.0
        %v1881 = vsel %vm1865, %v1842, 0.0
        %v1882 = vsel %vm1866, %v1841, 0.0
        %v1883 = vsel %vm1867, %v1840, 0.0
        %v1884 = vsel %vm1868, %v1839, 0.0
        %v1885 = vsel %vm1869, %v1838, 0.0
        %v1886 = vsel %vm1870, %v1837, 0.0
        %v1887 = vsel %vm1871, %v1836, 0.0
        %v1888 = vsel %vm1872, %v1835, 0.0
        %v1889 = vsel %vm1873, %v1834, 0.0
        %v1890 = vsel %vm1874, %v1833, 0.0
        %v1891 = vsel %vm1875, %v1832, 0.0
        %v1892 = vsel %vm1876, %v1831, 0.0
        %v1893 = vsel %vm1877, %v1830, 0.0
        %1910 = vrot.lane.b32.xlu0 %v1781, 32
        %v1911 = vpop.permute.xlu0 %1910
        %1912 = vrot.lane.b32.xlu0 %v1782, 32
        %v1913 = vpop.permute.xlu0 %1912
        %1914 = vrot.lane.b32.xlu0 %v1783, 32
        %v1915 = vpop.permute.xlu0 %1914
        %1916 = vrot.lane.b32.xlu0 %v1784, 32
        %v1917 = vpop.permute.xlu0 %1916
        %1918 = vrot.lane.b32.xlu0 %v1785, 32
        %v1919 = vpop.permute.xlu0 %1918
        %1920 = vrot.lane.b32.xlu0 %v1786, 32
        %v1921 = vpop.permute.xlu0 %1920
        %1922 = vrot.lane.b32.xlu0 %v1787, 32
        %v1923 = vpop.permute.xlu0 %1922
        %1924 = vrot.lane.b32.xlu0 %v1788, 32
        %v1925 = vpop.permute.xlu0 %1924
        %1926 = vrot.lane.b32.xlu0 %v1789, 32
        %v1927 = vpop.permute.xlu0 %1926
        %1928 = vrot.lane.b32.xlu0 %v1790, 32
        %v1929 = vpop.permute.xlu0 %1928
        %1930 = vrot.lane.b32.xlu0 %v1791, 32
        %v1931 = vpop.permute.xlu0 %1930
        %1932 = vrot.lane.b32.xlu0 %v1792, 32
        %v1933 = vpop.permute.xlu0 %1932
        %1934 = vrot.lane.b32.xlu0 %v1793, 32
        %v1935 = vpop.permute.xlu0 %1934
        %1936 = vrot.lane.b32.xlu0 %v1794, 32
        %v1937 = vpop.permute.xlu0 %1936
        %1938 = vrot.lane.b32.xlu0 %v1795, 32
        %v1939 = vpop.permute.xlu0 %1938
        %1940 = vrot.lane.b32.xlu0 %v1796, 32
        %v1941 = vpop.permute.xlu0 %1940
        %v1958 = vsel %vm659, %v1878, %v1911
        %v1959 = vsel %vm659, %v1879, %v1913
        %v1960 = vsel %vm659, %v1880, %v1915
        %v1961 = vsel %vm659, %v1881, %v1917
        %v1962 = vsel %vm659, %v1882, %v1919
        %v1963 = vsel %vm659, %v1883, %v1921
        %v1964 = vsel %vm659, %v1884, %v1923
        %v1965 = vsel %vm659, %v1885, %v1925
        %v1966 = vsel %vm659, %v1886, %v1927
        %v1967 = vsel %vm659, %v1887, %v1929
        %v1968 = vsel %vm659, %v1888, %v1931
        %v1969 = vsel %vm659, %v1889, %v1933
        %v1970 = vsel %vm659, %v1890, %v1935
        %v1971 = vsel %vm659, %v1891, %v1937
        %v1972 = vsel %vm659, %v1892, %v1939
        %v1973 = vsel %vm659, %v1893, %v1941
        %v1974 = vpack.c.bf16 %v1959, %v1958
        %v1975 = vpack.c.bf16 %v1961, %v1960
        %v1976 = vpack.c.bf16 %v1963, %v1962
        %v1977 = vpack.c.bf16 %v1965, %v1964
        %v1978 = vpack.c.bf16 %v1967, %v1966
        %v1979 = vpack.c.bf16 %v1969, %v1968
        %v1980 = vpack.c.bf16 %v1971, %v1970
        %v1981 = vpack.c.bf16 %v1973, %v1972
        %v1982 = vld [vmem:[%s1 + $0x90] sm:$0xf]
        %v1983 = vld [vmem:[%s1 + $0x94] sm:$0xf]
        %v1984 = vld [vmem:[%s1 + $0x98] sm:$0xf]
        %v1985 = vld [vmem:[%s1 + $0x9c] sm:$0xf]
        %v1986 = vld [vmem:[%s1 + $0xa0] sm:$0xf]
        %v1987 = vld [vmem:[%s1 + $0xa4] sm:$0xf]
        %v1988 = vld [vmem:[%s1 + $0xa8] sm:$0xf]
        %v1989 = vld [vmem:[%s1 + $0xac] sm:$0xf]
        %v1990 = vld [vmem:[%s2 + $0x5] sm:$0x1]
        %v1991 = vperm.slane %v1990, 0
        %v2000 = vunpack.c.l.b16 %v1982
        %v2001 = vunpack.c.l.b16 %v1983
        %v2002 = vunpack.c.l.b16 %v1984
        %v2003 = vunpack.c.l.b16 %v1985
        %v2004 = vunpack.c.l.b16 %v1986
        %v2005 = vunpack.c.l.b16 %v1987
        %v2006 = vunpack.c.l.b16 %v1988
        %v2007 = vunpack.c.l.b16 %v1989
        %v2008 = vpack.c.b16 %v2001, %v2000
        %v2009 = vpack.c.b16 %v2003, %v2002
        %v2010 = vpack.c.b16 %v2005, %v2004
        %v2011 = vpack.c.b16 %v2007, %v2006
        %v2017 = vsel %vm718, %v1974, 0
        %v2020 = vsel %vm718, %v1975, 0
        %v2023 = vsel %vm718, %v1976, 0
        %v2026 = vsel %vm718, %v1977, 0
        %v2029 = vsel %vm718, %v1978, 0
        %v2032 = vsel %vm718, %v1979, 0
        %v2035 = vsel %vm718, %v1980, 0
        %v2038 = vsel %vm718, %v1981, 0
        %2040 = vmatpush.bf16.msra.mxu0 0
        %2041 = vmatpush.bf16.msra.mxu0 0
        %2042 = vmatpush.bf16.msra.mxu0 0
        %2043 = vmatpush.bf16.msra.mxu0 0
        %2044 = vmatpush.bf16.msra.mxu0 %v2011
        %2045 = vmatpush.bf16.msra.mxu0 %v2010
        %2046 = vmatpush.bf16.msra.mxu0 %v2009
        %2047 = vmatpush.bf16.msra.mxu0 %v2008
        %2048 = vmatmul.bf16.gmra.mxu0 %v2017
        %v2049 = vpop.f32.mrf.mxu0
        %v2050 = vadd.f32 %v1991, %v2049
        %v2051 = vpop.f32.mrf.mxu0
        %v2052 = vadd.f32 %v1991, %v2051
        %2053 = vmatmul.bf16.gmra.mxu0 %v2020
        %v2054 = vpop.f32.mrf.mxu0
        %v2055 = vadd.f32 %v1991, %v2054
        %v2056 = vpop.f32.mrf.mxu0
        %v2057 = vadd.f32 %v1991, %v2056
        %2058 = vmatmul.bf16.gmra.mxu0 %v2023
        %v2059 = vpop.f32.mrf.mxu0
        %v2060 = vadd.f32 %v1991, %v2059
        %v2061 = vpop.f32.mrf.mxu0
        %v2062 = vadd.f32 %v1991, %v2061
        %2063 = vmatmul.bf16.gmra.mxu0 %v2026
        %v2064 = vpop.f32.mrf.mxu0
        %v2065 = vadd.f32 %v1991, %v2064
        %v2066 = vpop.f32.mrf.mxu0
        %v2067 = vadd.f32 %v1991, %v2066
        %2068 = vmatmul.bf16.gmra.mxu0 %v2029
        %v2069 = vpop.f32.mrf.mxu0
        %v2070 = vadd.f32 %v1991, %v2069
        %v2071 = vpop.f32.mrf.mxu0
        %v2072 = vadd.f32 %v1991, %v2071
        %2073 = vmatmul.bf16.gmra.mxu0 %v2032
        %v2074 = vpop.f32.mrf.mxu0
        %v2075 = vadd.f32 %v1991, %v2074
        %v2076 = vpop.f32.mrf.mxu0
        %v2077 = vadd.f32 %v1991, %v2076
        %2078 = vmatmul.bf16.gmra.mxu0 %v2035
        %v2079 = vpop.f32.mrf.mxu0
        %v2080 = vadd.f32 %v1991, %v2079
        %v2081 = vpop.f32.mrf.mxu0
        %v2082 = vadd.f32 %v1991, %v2081
        %2083 = vmatmul.bf16.gmra.mxu0 %v2038
        %v2084 = vpop.f32.mrf.mxu0
        %v2085 = vadd.f32 %v1991, %v2084
        %v2086 = vpop.f32.mrf.mxu0
        %v2087 = vadd.f32 %v1991, %v2086
        %2088 = vdwg.mxu0
        %v2089 = vmax.f32 %v2050, 0.0
        %v2090 = vmax.f32 %v2052, 0.0
        %v2091 = vmax.f32 %v2055, 0.0
        %v2092 = vmax.f32 %v2057, 0.0
        %v2093 = vmax.f32 %v2060, 0.0
        %v2094 = vmax.f32 %v2062, 0.0
        %v2095 = vmax.f32 %v2065, 0.0
        %v2096 = vmax.f32 %v2067, 0.0
        %v2097 = vmax.f32 %v2070, 0.0
        %v2098 = vmax.f32 %v2072, 0.0
        %v2099 = vmax.f32 %v2075, 0.0
        %v2100 = vmax.f32 %v2077, 0.0
        %v2101 = vmax.f32 %v2080, 0.0
        %v2102 = vmax.f32 %v2082, 0.0
        %v2103 = vmax.f32 %v2085, 0.0
        %v2104 = vmax.f32 %v2087, 0.0
        %v2105 = vrot.slane %v2089, 4
        %v2106 = vrot.slane %v2090, 4
        %v2107 = vrot.slane %v2091, 4
        %v2108 = vrot.slane %v2092, 4
        %v2109 = vrot.slane %v2093, 4
        %v2110 = vrot.slane %v2094, 4
        %v2111 = vrot.slane %v2095, 4
        %v2112 = vrot.slane %v2096, 4
        %v2113 = vrot.slane %v2097, 4
        %v2114 = vrot.slane %v2098, 4
        %v2115 = vrot.slane %v2099, 4
        %v2116 = vrot.slane %v2100, 4
        %v2117 = vrot.slane %v2101, 4
        %v2118 = vrot.slane %v2102, 4
        %v2119 = vrot.slane %v2103, 4
        %v2120 = vrot.slane %v2104, 4
        %v2121 = vsel %vm1829, %v2119, %v2120
        %v2122 = vsel %vm1829, %v2118, %v2119
        %v2123 = vsel %vm1829, %v2117, %v2118
        %v2124 = vsel %vm1829, %v2116, %v2117
        %v2125 = vsel %vm1829, %v2115, %v2116
        %v2126 = vsel %vm1829, %v2114, %v2115
        %v2127 = vsel %vm1829, %v2113, %v2114
        %v2128 = vsel %vm1829, %v2112, %v2113
        %v2129 = vsel %vm1829, %v2111, %v2112
        %v2130 = vsel %vm1829, %v2110, %v2111
        %v2131 = vsel %vm1829, %v2109, %v2110
        %v2132 = vsel %vm1829, %v2108, %v2109
        %v2133 = vsel %vm1829, %v2107, %v2108
        %v2134 = vsel %vm1829, %v2106, %v2107
        %v2135 = vsel %vm1829, %v2105, %v2106
        %v2136 = vsel %vm1829, %v2120, %v2105
        %v2137 = vsel %vm1862, %v2136, 0.0
        %v2138 = vsel %vm1863, %v2135, 0.0
        %v2139 = vsel %vm1864, %v2134, 0.0
        %v2140 = vsel %vm1865, %v2133, 0.0
        %v2141 = vsel %vm1866, %v2132, 0.0
        %v2142 = vsel %vm1867, %v2131, 0.0
        %v2143 = vsel %vm1868, %v2130, 0.0
        %v2144 = vsel %vm1869, %v2129, 0.0
        %v2145 = vsel %vm1870, %v2128, 0.0
        %v2146 = vsel %vm1871, %v2127, 0.0
        %v2147 = vsel %vm1872, %v2126, 0.0
        %v2148 = vsel %vm1873, %v2125, 0.0
        %v2149 = vsel %vm1874, %v2124, 0.0
        %v2150 = vsel %vm1875, %v2123, 0.0
        %v2151 = vsel %vm1876, %v2122, 0.0
        %v2152 = vsel %vm1877, %v2121, 0.0
        %2169 = vrot.lane.b32.xlu0 %v2089, 32
        %v2170 = vpop.permute.xlu0 %2169
        %2171 = vrot.lane.b32.xlu0 %v2090, 32
        %v2172 = vpop.permute.xlu0 %2171
        %2173 = vrot.lane.b32.xlu0 %v2091, 32
        %v2174 = vpop.permute.xlu0 %2173
        %2175 = vrot.lane.b32.xlu0 %v2092, 32
        %v2176 = vpop.permute.xlu0 %2175
        %2177 = vrot.lane.b32.xlu0 %v2093, 32
        %v2178 = vpop.permute.xlu0 %2177
        %2179 = vrot.lane.b32.xlu0 %v2094, 32
        %v2180 = vpop.permute.xlu0 %2179
        %2181 = vrot.lane.b32.xlu0 %v2095, 32
        %v2182 = vpop.permute.xlu0 %2181
        %2183 = vrot.lane.b32.xlu0 %v2096, 32
        %v2184 = vpop.permute.xlu0 %2183
        %2185 = vrot.lane.b32.xlu0 %v2097, 32
        %v2186 = vpop.permute.xlu0 %2185
        %2187 = vrot.lane.b32.xlu0 %v2098, 32
        %v2188 = vpop.permute.xlu0 %2187
        %2189 = vrot.lane.b32.xlu0 %v2099, 32
        %v2190 = vpop.permute.xlu0 %2189
        %2191 = vrot.lane.b32.xlu0 %v2100, 32
        %v2192 = vpop.permute.xlu0 %2191
        %2193 = vrot.lane.b32.xlu0 %v2101, 32
        %v2194 = vpop.permute.xlu0 %2193
        %2195 = vrot.lane.b32.xlu0 %v2102, 32
        %v2196 = vpop.permute.xlu0 %2195
        %2197 = vrot.lane.b32.xlu0 %v2103, 32
        %v2198 = vpop.permute.xlu0 %2197
        %2199 = vrot.lane.b32.xlu0 %v2104, 32
        %v2200 = vpop.permute.xlu0 %2199
        %v2217 = vsel %vm659, %v2137, %v2170
        %v2218 = vsel %vm659, %v2138, %v2172
        %v2219 = vsel %vm659, %v2139, %v2174
        %v2220 = vsel %vm659, %v2140, %v2176
        %v2221 = vsel %vm659, %v2141, %v2178
        %v2222 = vsel %vm659, %v2142, %v2180
        %v2223 = vsel %vm659, %v2143, %v2182
        %v2224 = vsel %vm659, %v2144, %v2184
        %v2225 = vsel %vm659, %v2145, %v2186
        %v2226 = vsel %vm659, %v2146, %v2188
        %v2227 = vsel %vm659, %v2147, %v2190
        %v2228 = vsel %vm659, %v2148, %v2192
        %v2229 = vsel %vm659, %v2149, %v2194
        %v2230 = vsel %vm659, %v2150, %v2196
        %v2231 = vsel %vm659, %v2151, %v2198
        %v2232 = vsel %vm659, %v2152, %v2200
        %v2233 = vpack.c.bf16 %v2218, %v2217
        %v2234 = vpack.c.bf16 %v2220, %v2219
        %v2235 = vpack.c.bf16 %v2222, %v2221
        %v2236 = vpack.c.bf16 %v2224, %v2223
        %v2237 = vpack.c.bf16 %v2226, %v2225
        %v2238 = vpack.c.bf16 %v2228, %v2227
        %v2239 = vpack.c.bf16 %v2230, %v2229
        %v2240 = vpack.c.bf16 %v2232, %v2231
        %v2241 = vld [vmem:[%s1 + $0xb0] sm:$0xf]
        %v2242 = vld [vmem:[%s1 + $0xb4] sm:$0xf]
        %v2243 = vld [vmem:[%s1 + $0xb8] sm:$0xf]
        %v2244 = vld [vmem:[%s1 + $0xbc] sm:$0xf]
        %v2245 = vld [vmem:[%s1 + $0xc0] sm:$0xf]
        %v2246 = vld [vmem:[%s1 + $0xc4] sm:$0xf]
        %v2247 = vld [vmem:[%s1 + $0xc8] sm:$0xf]
        %v2248 = vld [vmem:[%s1 + $0xcc] sm:$0xf]
        %v2249 = vld [vmem:[%s2 + $0x6] sm:$0x1]
        %v2250 = vperm.slane %v2249, 0
        %v2259 = vunpack.c.l.b16 %v2241
        %v2260 = vunpack.c.l.b16 %v2242
        %v2261 = vunpack.c.l.b16 %v2243
        %v2262 = vunpack.c.l.b16 %v2244
        %v2263 = vunpack.c.l.b16 %v2245
        %v2264 = vunpack.c.l.b16 %v2246
        %v2265 = vunpack.c.l.b16 %v2247
        %v2266 = vunpack.c.l.b16 %v2248
        %v2267 = vpack.c.b16 %v2260, %v2259
        %v2268 = vpack.c.b16 %v2262, %v2261
        %v2269 = vpack.c.b16 %v2264, %v2263
        %v2270 = vpack.c.b16 %v2266, %v2265
        %v2276 = vsel %vm718, %v2233, 0
        %v2279 = vsel %vm718, %v2234, 0
        %v2282 = vsel %vm718, %v2235, 0
        %v2285 = vsel %vm718, %v2236, 0
        %v2288 = vsel %vm718, %v2237, 0
        %v2291 = vsel %vm718, %v2238, 0
        %v2294 = vsel %vm718, %v2239, 0
        %v2297 = vsel %vm718, %v2240, 0
        %2299 = vmatpush.bf16.msra.mxu0 0
        %2300 = vmatpush.bf16.msra.mxu0 0
        %2301 = vmatpush.bf16.msra.mxu0 0
        %2302 = vmatpush.bf16.msra.mxu0 0
        %2303 = vmatpush.bf16.msra.mxu0 %v2270
        %2304 = vmatpush.bf16.msra.mxu0 %v2269
        %2305 = vmatpush.bf16.msra.mxu0 %v2268
        %2306 = vmatpush.bf16.msra.mxu0 %v2267
        %2307 = vmatmul.bf16.gmra.mxu0 %v2276
        %v2308 = vpop.f32.mrf.mxu0
        %v2309 = vpop.f32.mrf.mxu0
        %2310 = vmatmul.bf16.gmra.mxu0 %v2279
        %v2311 = vpop.f32.mrf.mxu0
        %v2312 = vpop.f32.mrf.mxu0
        %2313 = vmatmul.bf16.gmra.mxu0 %v2282
        %v2314 = vpop.f32.mrf.mxu0
        %v2315 = vpop.f32.mrf.mxu0
        %2316 = vmatmul.bf16.gmra.mxu0 %v2285
        %v2317 = vpop.f32.mrf.mxu0
        %v2318 = vpop.f32.mrf.mxu0
        %v2319 = vadd.f32 %v2250, %v2318
        %2320 = vmatmul.bf16.gmra.mxu0 %v2288
        %v2321 = vpop.f32.mrf.mxu0
        %v2322 = vpop.f32.mrf.mxu0
        %2323 = vmatmul.bf16.gmra.mxu0 %v2291
        %v2324 = vpop.f32.mrf.mxu0
        %v2325 = vpop.f32.mrf.mxu0
        %2326 = vmatmul.bf16.gmra.mxu0 %v2294
        %v2327 = vpop.f32.mrf.mxu0
        %v2328 = vpop.f32.mrf.mxu0
        %2329 = vmatmul.bf16.gmra.mxu0 %v2297
        %v2330 = vpop.f32.mrf.mxu0
        %v2331 = vpop.f32.mrf.mxu0
        %v2332 = vadd.f32 %v2250, %v2331
        %2333 = vdwg.mxu0
        %v2334 = vmax.f32 %v2319, 0.0
        %v2335 = vmax.f32 %v2332, 0.0
        %v2336 = vld [vmem:[%s1 + $0xd0] sm:$0xf]
        %v2337 = vld [vmem:[%s1 + $0xd4] sm:$0xf]
        %v2338 = vld [vmem:[%s1 + $0xd8] sm:$0xf]
        %v2339 = vld [vmem:[%s1 + $0xdc] sm:$0xf]
        %v2340 = vld [vmem:[%s2 + $0x7] sm:$0x1]
        %v2341 = vpack.c.bf16 %v1782, %v1781
        %v2342 = vpack.c.bf16 %v1784, %v1783
        %v2343 = vpack.c.bf16 %v1786, %v1785
        %v2344 = vpack.c.bf16 %v1788, %v1787
        %v2345 = vpack.c.bf16 %v1790, %v1789
        %v2346 = vpack.c.bf16 %v1792, %v1791
        %v2347 = vpack.c.bf16 %v1794, %v1793
        %v2348 = vpack.c.bf16 %v1796, %v1795
        %v2349 = vperm.slane %v2340, 0
        %v2354 = vunpack.c.l.b16 %v2336
        %v2355 = vunpack.c.l.b16 %v2337
        %v2356 = vunpack.c.l.b16 %v2338
        %v2357 = vunpack.c.l.b16 %v2339
        %v2358 = vpack.c.b16 %v2355, %v2354
        %v2359 = vpack.c.b16 %v2357, %v2356
        %v2363 = vsel %vm659, %v2341, 0
        %v2366 = vsel %vm659, %v2342, 0
        %v2369 = vsel %vm659, %v2343, 0
        %v2372 = vsel %vm659, %v2344, 0
        %v2375 = vsel %vm659, %v2345, 0
        %v2378 = vsel %vm659, %v2346, 0
        %v2381 = vsel %vm659, %v2347, 0
        %v2384 = vsel %vm659, %v2348, 0
        %2386 = vmatpush.bf16.msra.mxu0 0
        %2387 = vmatpush.bf16.msra.mxu0 0
        %2388 = vmatpush.bf16.msra.mxu0 0
        %2389 = vmatpush.bf16.msra.mxu0 0
        %2390 = vmatpush.bf16.msra.mxu0 0
        %2391 = vmatpush.bf16.msra.mxu0 0
        %2392 = vmatpush.bf16.msra.mxu0 %v2359
        %2393 = vmatpush.bf16.msra.mxu0 %v2358
        %2394 = vmatmul.bf16.gmra.mxu0 %v2363
        %v2395 = vpop.f32.mrf.mxu0
        %v2396 = vpop.f32.mrf.mxu0
        %2397 = vmatmul.bf16.gmra.mxu0 %v2366
        %v2398 = vpop.f32.mrf.mxu0
        %v2399 = vpop.f32.mrf.mxu0
        %2400 = vmatmul.bf16.gmra.mxu0 %v2369
        %v2401 = vpop.f32.mrf.mxu0
        %v2402 = vpop.f32.mrf.mxu0
        %2403 = vmatmul.bf16.gmra.mxu0 %v2372
        %v2404 = vpop.f32.mrf.mxu0
        %v2405 = vpop.f32.mrf.mxu0
        %v2406 = vadd.f32 %v2349, %v2405
        %2407 = vmatmul.bf16.gmra.mxu0 %v2375
        %v2408 = vpop.f32.mrf.mxu0
        %v2409 = vpop.f32.mrf.mxu0
        %2410 = vmatmul.bf16.gmra.mxu0 %v2378
        %v2411 = vpop.f32.mrf.mxu0
        %v2412 = vpop.f32.mrf.mxu0
        %2413 = vmatmul.bf16.gmra.mxu0 %v2381
        %v2414 = vpop.f32.mrf.mxu0
        %v2415 = vpop.f32.mrf.mxu0
        %2416 = vmatmul.bf16.gmra.mxu0 %v2384
        %v2417 = vpop.f32.mrf.mxu0
        %v2418 = vpop.f32.mrf.mxu0
        %v2419 = vadd.f32 %v2349, %v2418
        %2420 = vdwg.mxu0
        %v2421 = vadd.f32 %v2334, %v2406
        %v2422 = vadd.f32 %v2335, %v2419
        %v2423 = vmax.f32 %v2421, 0.0
        %v2424 = vmax.f32 %v2422, 0.0
        %v2426 = vrot.slane %v2423, 7
        %v2429 = vrot.slane %v2424, 6
        %vm2431 = vcmask 1040384
        %v2432 = vsel %vm2431, %v2426, %v2429
        %v2433 = vld [vmem:[%s1 + $0xe0] sm:$0xf]
        %v2434 = vld [vmem:[%s1 + $0xe4] sm:$0xf]
        %v2435 = vld [vmem:[%s1 + $0xe8] sm:$0xf]
        %v2436 = vld [vmem:[%s1 + $0xec] sm:$0xf]
        %v2437 = vld [vmem:[%s2 + $0x8] sm:$0x1]
        %v2438 = vpack.c.bf16 %v2432, %v2432
        %v2443 = vunpack.c.l.b16 %v2433
        %v2444 = vunpack.c.l.b16 %v2434
        %v2445 = vunpack.c.l.b16 %v2435
        %v2446 = vunpack.c.l.b16 %v2436
        %v2447 = vpack.c.b16 %v2444, %v2443
        %v2448 = vpack.c.b16 %v2446, %v2445
        %v2452 = vsel %vm659, %v2438, 0
        %2454 = vmatpush.bf16.msra.mxu0 0
        %2455 = vmatpush.bf16.msra.mxu0 0
        %2456 = vmatpush.bf16.msra.mxu0 0
        %2457 = vmatpush.bf16.msra.mxu0 0
        %2458 = vmatpush.bf16.msra.mxu0 0
        %2459 = vmatpush.bf16.msra.mxu0 0
        %2460 = vmatpush.bf16.msra.mxu0 %v2448
        %2461 = vmatpush.bf16.msra.mxu0 %v2447
        %2462 = vmatmul.bf16.gmra.mxu0 %v2452
        %v2463 = vpop.f32.mrf.mxu0
        %v2464 = vadd.f32 0.0, %v2463
        %v2465 = vpop.f32.mrf.mxu0
        %2466 = vdwg.mxu0
        %v2467 = vperm.slane %v2437, 0
        %v2468 = vadd.f32 %v2464, %v2467
        %vm2469 = vcmask 58368
        %v2470 = vsel %vm2469, %v2468, -inf
        %2471 = vmax.xlane.f32.xlu0 %v2470
        %v2472 = vpop.xlane.xlu0 %2471
        %v2473 = vsub.f32 %v2468, %v2472
        %v2474 = vmul.f32 %v2473, 1.442695
        %v2475 = vpow.pop %v2474
        %v2476 = vsel %vm2469, %v2475, 0.0
        %2477 = vadd.xlane.f32.xlu0 %v2476
        %v2478 = vpop.xlane.xlu0 %2477
        %v2479 = vlog2.pop %v2478
        %v2480 = vmul.f32 %v2479, 0.6931472
        %v2481 = vsub.f32 %v2473, %v2480
        %2482 = vst.msk [vmem:[%s164] sm:$0x3] %vm2469, %v2481
        %s2483 = sand.u32 %s93, 1
        %s2484 = scalar_lea.sflag [#allocation3], %s2483
        %s2485 = sand.u32 %s93, 1
        %s2486 = smul.addr %s2485, 2
        %s2487 = scalar_lea.vmem [#allocation2], %s2486
        // Predicated region
        $region33: #{tpu_custom_call.1} parent=31 // pred_check
          %p2488 = pneg %p103
        $region34: #{tpu_custom_call.1} parent=31 // pred_check_branch
          %2490 = sbr.rel (%p2488) target = $region36
        $region35: #{tpu_custom_call.1} parent=31 // pred_region
          %2492 = vsyncadd %s2484, 0
          %s2493 = smul.addr %s17, 2
          %s2494 = scalar_lea.hbm %s3, %s2493
          %s2496 = sshll.u32 %s2487, 4
          %s2497 = int_to_ptr.vmem [resolvable:$true] %s2496
          %s2498 = sshll.u32 %s2494, 4
          %s2499 = int_to_ptr.hbm [resolvable:$true] %s2498
          %2501 = dma.vmem_to_hbm [thread:$0]  %s2497, 32, %s2499, %s2484
        $region36: #{tpu_custom_call.1} parent=31 // pred_fallthru
          _
      $region32: #{tpu_custom_call.1} parent=5 // pred_fallthru
        _
      %p2502 = scmp.le.s32.totalorder 2, %s12
      // Predicated region
      $region37: #{tpu_custom_call.1} parent=5 // pred_check
        %p2503 = pneg %p2502
      $region38: #{tpu_custom_call.1} parent=5 // pred_check_branch
        %2505 = sbr.rel (%p2503) target = $region40
      $region39: #{tpu_custom_call.1} parent=5 // pred_region
        %s2506 = ssub.s32 %s12, 2
        // Predicated region
        $region41: #{tpu_custom_call.1} parent=39 // pred_check
          %p2507 = pneg %p109
        $region42: #{tpu_custom_call.1} parent=39 // pred_check_branch
          %2509 = sbr.rel (%p2507) target = $region44
        $region43: #{tpu_custom_call.1} parent=39 // pred_region
          %s2510 = sand.u32 %s94, 1
          %s2511 = scalar_lea.sflag [#allocation3], %s2510
          %s2512 = sand.u32 %s94, 1
          %s2513 = smul.addr %s2512, 2
          %s2514 = scalar_lea.vmem [#allocation2], %s2513
          %2516 = dma.done %s2511, 32
        $region44: #{tpu_custom_call.1} parent=39 // pred_fallthru
          _
      $region40: #{tpu_custom_call.1} parent=5 // pred_fallthru
        _
    $region6: #{tpu_custom_call.1} parent=1 // loop_footer
      %s16 = sadd.s32 1, %s12
    $region7: #{tpu_custom_call.1} parent=1 // loop_footer_branch
      %11 = sbr.rel target = $region3
    $region8: #{tpu_custom_call.1} parent=1 // loop_exit
      _
    %2517 = vsyncpa [#allocation3], 1
    %s2518 = scalar_lea.sflag [#allocation3], 1
    %2519 = vsyncpa %s2518, 1

</llo_original>
